<compile_context>
chip_gen: v6e
topology: v6e:2x2x1
jax: 0.10.0
libtpu: 0.0.40
codegen_flags: <defaults>
</compile_context>

<pallas_src>
import functools
import math

import jax
import jax.numpy as jnp
from jax.experimental import pallas as pl
from jax.experimental.pallas import tpu as pltpu


def mha_kernel(q_ref, k_ref, v_ref,
               wqkv_ref,           # (3, H, D, d_k)  compute dtype, scale folded into [0]
               wo_ref,             # (H, d_k, D)     compute dtype
               bqkv_ref,           # (3, H, 1, d_k)  f32, scale folded into [0]
               bo_ref,             # (1, D)          f32
               o_ref,              # (block_q, D)
               kh_scr, vh_scr,     # VMEM (H, S, d_k) compute dtype
               *, heads: int, compute_dtype, approx_recip: bool):
    cdt = compute_dtype

    # ---- K/V projections: once per batch element, reused by all Q-blocks ----
    @pl.when(pl.program_id(1) == 0)
    def _():
        k = k_ref[...]                                          # (S, D)
        v = v_ref[...]                                          # (S, D)
        for h in range(heads):                                  # static unroll
            kh_scr[h] = (jnp.dot(k, wqkv_ref[1, h],
                                 preferred_element_type=jnp.float32)
                         + bqkv_ref[1, h]).astype(cdt)          # (S, d_k)
            vh_scr[h] = (jnp.dot(v, wqkv_ref[2, h],
                                 preferred_element_type=jnp.float32)
                         + bqkv_ref[2, h]).astype(cdt)          # (S, d_k)

    # ---- Q projection for this block (1/sqrt(d_k) already folded in) --------
    q = q_ref[...]                                              # (block_q, D)
    qh = jnp.stack(
        [(jnp.dot(q, wqkv_ref[0, h], preferred_element_type=jnp.float32)
          + bqkv_ref[0, h]) for h in range(heads)],
        axis=0).astype(cdt)                                     # (H, bq, d_k)

    # ---- attention: all heads as one batched matmul pair ---------------------
    scores = jnp.einsum("hqf,hkf->hqk", qh, kh_scr[...],
                        preferred_element_type=jnp.float32)     # (H, bq, S) f32
    m = jnp.max(scores, axis=-1, keepdims=True)                 # f32
    # exp in the compute dtype (bf16 EUP on v6e/v7x); l-sum stays f32.
    e = jnp.exp((scores - m).astype(cdt))
    l = jnp.sum(e.astype(jnp.float32), axis=-1, keepdims=True)  # (H, bq, 1)

    # Unnormalized e @ V; deferred row normalization on the small (H,bq,d_k).
    attn = jnp.einsum("hqk,hkf->hqf", e, vh_scr[...],
                      preferred_element_type=jnp.float32)       # (H, bq, d_k)
    attn = attn * pl.reciprocal(l, approx=approx_recip)

    # ---- fused output projection: batched contraction + leading-axis sum ----
    part = jnp.einsum("hqf,hfD->hqD", attn.astype(cdt), wo_ref[...],
                      preferred_element_type=jnp.float32)       # (H, bq, D)
    out = jnp.sum(part, axis=0) + bo_ref[...]                   # (bq, D) f32
    o_ref[...] = out.astype(o_ref.dtype)


def multi_head_attention(q, k, v, params, *, heads: int,
                         block_q: int | None = None,
                         compute_dtype=jnp.bfloat16):
    """q, k, v: (B, S, D). params: PyTorch-layout weights. Returns (B, S, D)."""
    B, S, D = q.shape
    if D % heads != 0:
        raise ValueError(f"d_model={D} must be divisible by heads={heads}")
    d_k = D // heads
    scale = 1.0 / math.sqrt(d_k)
    cdt = jnp.dtype(compute_dtype)

    # ---- one-time host-side prep --------------------------------------------
    # Per-head panels of the transposed weights; head h owns output features
    # [h*d_k, (h+1)*d_k) of the projection / input rows of the out-projection.
    def head_panels(w, s=1.0):
        return (w.T * s).reshape(D, heads, d_k).transpose(1, 0, 2)   # (H, D, d_k)

    wqkv_h = jnp.stack([head_panels(params["wq"], scale),
                        head_panels(params["wk"]),
                        head_panels(params["wv"])], axis=0).astype(cdt)  # (3,H,D,d_k)
    wo_h = params["wo"].T.reshape(heads, d_k, D).astype(cdt)             # (H,d_k,D)
    bqkv_h = jnp.stack([(params["bq"] * scale).reshape(heads, 1, d_k),
                        params["bk"].reshape(heads, 1, d_k),
                        params["bv"].reshape(heads, 1, d_k)],
                       axis=0).astype(jnp.float32)                       # (3,H,1,d_k)
    bo = params["bo"].reshape(1, D).astype(jnp.float32)

    q_c = q.astype(cdt)
    k_c = k.astype(cdt)
    v_c = v.astype(cdt)

    # ---- Q-block tiling ------------------------------------------------------
    # Prefer large tiles (>=512/256 fill the 256-deep v6e/v7x MXU and amortize
    # per-grid-step overhead; 128-256 already saturates the 4x128 v5e MXU).
    if block_q is None:
        block_q = S
        for cand in (512, 256, 128, 64, 32, 16, 8):
            if S % cand == 0:
                block_q = cand
                break
    if S % block_q != 0:
        raise ValueError(f"block_q={block_q} must divide S={S}")
    if block_q != S and block_q % 8 != 0:
        raise ValueError("block_q must be a multiple of 8 (sublane tiling)")
    n_q = S // block_q

    # ---- VMEM budget: generation-aware (~7/8 of physical capacity) ----------
    try:
        vmem_cap = int(pltpu.get_tpu_info().vmem_capacity_bytes)
    except Exception:
        vmem_cap = 64 * 1024 * 1024      # conservative fallback (v7x-sized)
    vmem_limit = min(vmem_cap * 7 // 8, 112 * 1024 * 1024)

    q_spec = pl.BlockSpec((pl.Squeezed(), block_q, D), lambda b, qi: (b, qi, 0))
    kv_spec = pl.BlockSpec((pl.Squeezed(), S, D), lambda b, qi: (b, 0, 0))
    wqkv_spec = pl.BlockSpec((3, heads, D, d_k), lambda b, qi: (0, 0, 0, 0))
    wo_spec = pl.BlockSpec((heads, d_k, D), lambda b, qi: (0, 0, 0))
    bqkv_spec = pl.BlockSpec((3, heads, 1, d_k), lambda b, qi: (0, 0, 0, 0))
    bo_spec = pl.BlockSpec((1, D), lambda b, qi: (0, 0))
    out_spec = pl.BlockSpec((pl.Squeezed(), block_q, D), lambda b, qi: (b, qi, 0))

    kernel = functools.partial(
        mha_kernel, heads=heads, compute_dtype=cdt,
        approx_recip=(cdt == jnp.dtype(jnp.bfloat16)))

    itemsize = jnp.dtype(cdt).itemsize
    cost = pl.CostEstimate(
        flops=int(B * (8 * S * D * D + 4 * heads * S * S * d_k)),
        transcendentals=int(B * heads * S * S),
        bytes_accessed=int(3 * B * S * D * itemsize          # q, k, v in
                           + 4 * D * D * itemsize            # packed weights
                           + 4 * D * 4                       # biases (f32)
                           + B * S * D * jnp.dtype(q.dtype).itemsize),  # out
    )

    return pl.pallas_call(
        kernel,
        out_shape=jax.ShapeDtypeStruct((B, S, D), q.dtype),
        grid_spec=pltpu.PrefetchScalarGridSpec(
            num_scalar_prefetch=0,
            grid=(B, n_q),
            in_specs=[q_spec, kv_spec, kv_spec,
                      wqkv_spec, wo_spec, bqkv_spec, bo_spec],
            out_specs=out_spec,
            scratch_shapes=[pltpu.VMEM((heads, S, d_k), cdt),   # K heads
                            pltpu.VMEM((heads, S, d_k), cdt)],  # V heads
        ),
        compiler_params=pltpu.CompilerParams(
            # batch "parallel" keeps megacore / 2-TC sharding; the Q axis is
            # "arbitrary" so the once-per-batch K/V projection scratch is
            # valid across all Q-blocks of that batch element.
            dimension_semantics=("parallel", "arbitrary"),
            vmem_limit_bytes=int(vmem_limit),
        ),
        cost_estimate=cost,
    )(q_c, k_c, v_c, wqkv_h, wo_h, bqkv_h, bo)


def reference_mha(q, k, v, params, *, heads: int):
    """Pure-JAX reference mirroring the PyTorch module (f32)."""
    B, S, D = q.shape
    d_k = D // heads

    def lin(x, w, b):
        return x @ w.T + b

    qp = lin(q, params["wq"], params["bq"]).reshape(B, S, heads, d_k).transpose(0, 2, 1, 3)
    kp = lin(k, params["wk"], params["bk"]).reshape(B, S, heads, d_k).transpose(0, 2, 1, 3)
    vp = lin(v, params["wv"], params["bv"]).reshape(B, S, heads, d_k).transpose(0, 2, 1, 3)

    scores = jnp.einsum("bhqd,bhkd->bhqk", qp, kp) / math.sqrt(d_k)
    scores = jax.nn.softmax(scores, axis=-1)
    out = jnp.einsum("bhqk,bhkd->bhqd", scores, vp)
    concat = out.transpose(0, 2, 1, 3).reshape(B, S, D)
    return lin(concat, params["wo"], params["bo"])


def init_params(key, d_model):
    # Deterministic synthetic init (PyTorch-Linear-like uniform bounds).
    bound = 1.0 / math.sqrt(d_model)
    keys = jax.random.split(key, 8)
    u = lambda kk, shape: jax.random.uniform(kk, shape, jnp.float32, -bound, bound)
    return {
        "wq": u(keys[0], (d_model, d_model)), "bq": u(keys[1], (d_model,)),
        "wk": u(keys[2], (d_model, d_model)), "bk": u(keys[3], (d_model,)),
        "wv": u(keys[4], (d_model, d_model)), "bv": u(keys[5], (d_model,)),
        "wo": u(keys[6], (d_model, d_model)), "bo": u(keys[7], (d_model,)),
    }


if __name__ == "__main__":
    B, S, D, HEADS = 2, 16, 32, 4   # small shapes consistent with sa_unet usage

    key = jax.random.PRNGKey(0)
    kq, kk, kv, kp = jax.random.split(key, 4)
    q = jax.random.normal(kq, (B, S, D), jnp.float32)
    k = jax.random.normal(kk, (B, S, D), jnp.float32)
    v = jax.random.normal(kv, (B, S, D), jnp.float32)
    params = init_params(kp, D)

    ref = reference_mha(q, k, v, params, heads=HEADS)

    # f32 compute path with block_q=8 (n_q=2): exercises the once-per-batch
    # K/V projection scratch reuse; exact reciprocal -> tight tolerance.
    out_f32 = multi_head_attention(q, k, v, params, heads=HEADS, block_q=8,
                                   compute_dtype=jnp.float32)
    out_f32 = jax.block_until_ready(out_f32)
    assert out_f32.shape == (B, S, D)
    assert jnp.allclose(out_f32, ref, atol=2e-3, rtol=2e-3), "f32 mismatch vs reference"

    # default bf16 MXU path (bf16 exp, approx reciprocal, f32 accumulation).
    out_bf16 = multi_head_attention(q, k, v, params, heads=HEADS)
    out_bf16 = jax.block_until_ready(out_bf16)
    assert out_bf16.shape == (B, S, D)
    assert jnp.allclose(out_bf16, ref, atol=5e-2, rtol=5e-2), "bf16 mismatch vs reference"

    print("KERNEL_OK")
</pallas_src>

<mosaic_0001>
module attributes {stable_mosaic.version = 11 : i64} {
  func.func @mha_kernel(%arg0: i32, %arg1: i32, %arg2: memref<1x8x32xf32, #tpu.memory_space<vmem>>, %arg3: memref<1x16x32xf32, #tpu.memory_space<vmem>>, %arg4: memref<1x16x32xf32, #tpu.memory_space<vmem>>, %arg5: memref<3x4x32x8xf32, #tpu.memory_space<vmem>>, %arg6: memref<4x8x32xf32, #tpu.memory_space<vmem>>, %arg7: memref<3x4x1x8xf32, #tpu.memory_space<vmem>>, %arg8: memref<1x32xf32, #tpu.memory_space<vmem>>, %arg9: memref<1x8x32xf32, #tpu.memory_space<vmem>>, %arg10: memref<4x16x8xf32, #tpu.memory_space<vmem>>, %arg11: memref<4x16x8xf32, #tpu.memory_space<vmem>>) attributes {dimension_semantics = [#tpu.dimension_semantics<parallel>, #tpu.dimension_semantics<arbitrary>], iteration_bounds = array<i64: 2, 2>, scalar_prefetch = 0 : i64, scratch_operands = 2 : i64, tpu.core_type = #tpu.core_type<tc>, window_params = [{transform_indices = @transform_0, window_bounds = array<i64: 1, 8, 32>}, {transform_indices = @transform_1, window_bounds = array<i64: 1, 16, 32>}, {transform_indices = @transform_2, window_bounds = array<i64: 1, 16, 32>}, {pipeline_mode = #tpu.pipeline_mode<synchronous>, transform_indices = @transform_3, window_bounds = array<i64: 3, 4, 32, 8>}, {pipeline_mode = #tpu.pipeline_mode<synchronous>, transform_indices = @transform_4, window_bounds = array<i64: 4, 8, 32>}, {pipeline_mode = #tpu.pipeline_mode<synchronous>, transform_indices = @transform_5, window_bounds = array<i64: 3, 4, 1, 8>}, {pipeline_mode = #tpu.pipeline_mode<synchronous>, transform_indices = @transform_6, window_bounds = array<i64: 1, 32>}, {transform_indices = @transform_7, window_bounds = array<i64: 1, 8, 32>}]} {
    %c0_i32 = arith.constant 0 : i32
    %0 = arith.cmpi eq, %arg1, %c0_i32 : i32
    %1 = arith.extui %0 : i1 to i32
    %c0_i32_0 = arith.constant 0 : i32
    %2 = arith.cmpi ne, %1, %c0_i32_0 : i32
    scf.if %2 {
      %c0_55 = arith.constant 0 : index
      %c0_56 = arith.constant 0 : index
      %c0_57 = arith.constant 0 : index
      %61 = vector.load %arg3[%c0_55, %c0_56, %c0_57] : memref<1x16x32xf32, #tpu.memory_space<vmem>>, vector<1x16x32xf32>
      %62 = vector.shape_cast %61 : vector<1x16x32xf32> to vector<16x32xf32>
      %c0_58 = arith.constant 0 : index
      %c0_59 = arith.constant 0 : index
      %c0_60 = arith.constant 0 : index
      %63 = vector.load %arg4[%c0_58, %c0_59, %c0_60] : memref<1x16x32xf32, #tpu.memory_space<vmem>>, vector<1x16x32xf32>
      %64 = vector.shape_cast %63 : vector<1x16x32xf32> to vector<16x32xf32>
      %c1_61 = arith.constant 1 : index
      %c0_62 = arith.constant 0 : index
      %c0_63 = arith.constant 0 : index
      %c0_64 = arith.constant 0 : index
      %65 = vector.load %arg5[%c1_61, %c0_62, %c0_63, %c0_64] : memref<3x4x32x8xf32, #tpu.memory_space<vmem>>, vector<1x1x32x8xf32>
      %66 = vector.shape_cast %65 : vector<1x1x32x8xf32> to vector<32x8xf32>
      %cst_65 = arith.constant dense<0.000000e+00> : vector<16x8xf32>
      %67 = tpu.matmul %62, %66, %cst_65 {dimension_numbers = #tpu.dot_dimension_numbers<[1], [0], [0], [1], [0, 0, 1, 1], [], []>} : vector<16x32xf32>, vector<32x8xf32>, vector<16x8xf32> -> vector<16x8xf32>
      %c1_66 = arith.constant 1 : index
      %c0_67 = arith.constant 0 : index
      %c0_68 = arith.constant 0 : index
      %c0_69 = arith.constant 0 : index
      %68 = vector.load %arg7[%c1_66, %c0_67, %c0_68, %c0_69] : memref<3x4x1x8xf32, #tpu.memory_space<vmem>>, vector<1x1x1x8xf32>
      %69 = vector.shape_cast %68 : vector<1x1x1x8xf32> to vector<1x8xf32>
      %70 = vector.broadcast %69 : vector<1x8xf32> to vector<16x8xf32>
      %71 = arith.addf %67, %70 : vector<16x8xf32>
      %c0_70 = arith.constant 0 : index
      %c0_71 = arith.constant 0 : index
      %c0_72 = arith.constant 0 : index
      %72 = vector.load %arg10[%c0_70, %c0_71, %c0_72] : memref<4x16x8xf32, #tpu.memory_space<vmem>>, vector<1x16x8xf32>
      %73 = vector.shape_cast %72 : vector<1x16x8xf32> to vector<16x8xf32>
      %74 = vector.shape_cast %71 : vector<16x8xf32> to vector<1x16x8xf32>
      tpu.vector_store %arg10[%c0_70, %c0_71, %c0_72], %74 {strides = array<i32>} : memref<4x16x8xf32, #tpu.memory_space<vmem>>, vector<1x16x8xf32>,
      %c2_73 = arith.constant 2 : index
      %c0_74 = arith.constant 0 : index
      %c0_75 = arith.constant 0 : index
      %c0_76 = arith.constant 0 : index
      %75 = vector.load %arg5[%c2_73, %c0_74, %c0_75, %c0_76] : memref<3x4x32x8xf32, #tpu.memory_space<vmem>>, vector<1x1x32x8xf32>
      %76 = vector.shape_cast %75 : vector<1x1x32x8xf32> to vector<32x8xf32>
      %cst_77 = arith.constant dense<0.000000e+00> : vector<16x8xf32>
      %77 = tpu.matmul %64, %76, %cst_77 {dimension_numbers = #tpu.dot_dimension_numbers<[1], [0], [0], [1], [0, 0, 1, 1], [], []>} : vector<16x32xf32>, vector<32x8xf32>, vector<16x8xf32> -> vector<16x8xf32>
      %c2_78 = arith.constant 2 : index
      %c0_79 = arith.constant 0 : index
      %c0_80 = arith.constant 0 : index
      %c0_81 = arith.constant 0 : index
      %78 = vector.load %arg7[%c2_78, %c0_79, %c0_80, %c0_81] : memref<3x4x1x8xf32, #tpu.memory_space<vmem>>, vector<1x1x1x8xf32>
      %79 = vector.shape_cast %78 : vector<1x1x1x8xf32> to vector<1x8xf32>
      %80 = vector.broadcast %79 : vector<1x8xf32> to vector<16x8xf32>
      %81 = arith.addf %77, %80 : vector<16x8xf32>
      %c0_82 = arith.constant 0 : index
      %c0_83 = arith.constant 0 : index
      %c0_84 = arith.constant 0 : index
      %82 = vector.load %arg11[%c0_82, %c0_83, %c0_84] : memref<4x16x8xf32, #tpu.memory_space<vmem>>, vector<1x16x8xf32>
      %83 = vector.shape_cast %82 : vector<1x16x8xf32> to vector<16x8xf32>
      %84 = vector.shape_cast %81 : vector<16x8xf32> to vector<1x16x8xf32>
      tpu.vector_store %arg11[%c0_82, %c0_83, %c0_84], %84 {strides = array<i32>} : memref<4x16x8xf32, #tpu.memory_space<vmem>>, vector<1x16x8xf32>,
      %c1_85 = arith.constant 1 : index
      %c1_86 = arith.constant 1 : index
      %c0_87 = arith.constant 0 : index
      %c0_88 = arith.constant 0 : index
      %85 = vector.load %arg5[%c1_85, %c1_86, %c0_87, %c0_88] : memref<3x4x32x8xf32, #tpu.memory_space<vmem>>, vector<1x1x32x8xf32>
      %86 = vector.shape_cast %85 : vector<1x1x32x8xf32> to vector<32x8xf32>
      %cst_89 = arith.constant dense<0.000000e+00> : vector<16x8xf32>
      %87 = tpu.matmul %62, %86, %cst_89 {dimension_numbers = #tpu.dot_dimension_numbers<[1], [0], [0], [1], [0, 0, 1, 1], [], []>} : vector<16x32xf32>, vector<32x8xf32>, vector<16x8xf32> -> vector<16x8xf32>
      %c1_90 = arith.constant 1 : index
      %c1_91 = arith.constant 1 : index
      %c0_92 = arith.constant 0 : index
      %c0_93 = arith.constant 0 : index
      %88 = vector.load %arg7[%c1_90, %c1_91, %c0_92, %c0_93] : memref<3x4x1x8xf32, #tpu.memory_space<vmem>>, vector<1x1x1x8xf32>
      %89 = vector.shape_cast %88 : vector<1x1x1x8xf32> to vector<1x8xf32>
      %90 = vector.broadcast %89 : vector<1x8xf32> to vector<16x8xf32>
      %91 = arith.addf %87, %90 : vector<16x8xf32>
      %c1_94 = arith.constant 1 : index
      %c0_95 = arith.constant 0 : index
      %c0_96 = arith.constant 0 : index
      %92 = vector.load %arg10[%c1_94, %c0_95, %c0_96] : memref<4x16x8xf32, #tpu.memory_space<vmem>>, vector<1x16x8xf32>
      %93 = vector.shape_cast %92 : vector<1x16x8xf32> to vector<16x8xf32>
      %94 = vector.shape_cast %91 : vector<16x8xf32> to vector<1x16x8xf32>
      tpu.vector_store %arg10[%c1_94, %c0_95, %c0_96], %94 {strides = array<i32>} : memref<4x16x8xf32, #tpu.memory_space<vmem>>, vector<1x16x8xf32>,
      %c2_97 = arith.constant 2 : index
      %c1_98 = arith.constant 1 : index
      %c0_99 = arith.constant 0 : index
      %c0_100 = arith.constant 0 : index
      %95 = vector.load %arg5[%c2_97, %c1_98, %c0_99, %c0_100] : memref<3x4x32x8xf32, #tpu.memory_space<vmem>>, vector<1x1x32x8xf32>
      %96 = vector.shape_cast %95 : vector<1x1x32x8xf32> to vector<32x8xf32>
      %cst_101 = arith.constant dense<0.000000e+00> : vector<16x8xf32>
      %97 = tpu.matmul %64, %96, %cst_101 {dimension_numbers = #tpu.dot_dimension_numbers<[1], [0], [0], [1], [0, 0, 1, 1], [], []>} : vector<16x32xf32>, vector<32x8xf32>, vector<16x8xf32> -> vector<16x8xf32>
      %c2_102 = arith.constant 2 : index
      %c1_103 = arith.constant 1 : index
      %c0_104 = arith.constant 0 : index
      %c0_105 = arith.constant 0 : index
      %98 = vector.load %arg7[%c2_102, %c1_103, %c0_104, %c0_105] : memref<3x4x1x8xf32, #tpu.memory_space<vmem>>, vector<1x1x1x8xf32>
      %99 = vector.shape_cast %98 : vector<1x1x1x8xf32> to vector<1x8xf32>
      %100 = vector.broadcast %99 : vector<1x8xf32> to vector<16x8xf32>
      %101 = arith.addf %97, %100 : vector<16x8xf32>
      %c1_106 = arith.constant 1 : index
      %c0_107 = arith.constant 0 : index
      %c0_108 = arith.constant 0 : index
      %102 = vector.load %arg11[%c1_106, %c0_107, %c0_108] : memref<4x16x8xf32, #tpu.memory_space<vmem>>, vector<1x16x8xf32>
      %103 = vector.shape_cast %102 : vector<1x16x8xf32> to vector<16x8xf32>
      %104 = vector.shape_cast %101 : vector<16x8xf32> to vector<1x16x8xf32>
      tpu.vector_store %arg11[%c1_106, %c0_107, %c0_108], %104 {strides = array<i32>} : memref<4x16x8xf32, #tpu.memory_space<vmem>>, vector<1x16x8xf32>,
      %c1_109 = arith.constant 1 : index
      %c2_110 = arith.constant 2 : index
      %c0_111 = arith.constant 0 : index
      %c0_112 = arith.constant 0 : index
      %105 = vector.load %arg5[%c1_109, %c2_110, %c0_111, %c0_112] : memref<3x4x32x8xf32, #tpu.memory_space<vmem>>, vector<1x1x32x8xf32>
      %106 = vector.shape_cast %105 : vector<1x1x32x8xf32> to vector<32x8xf32>
      %cst_113 = arith.constant dense<0.000000e+00> : vector<16x8xf32>
      %107 = tpu.matmul %62, %106, %cst_113 {dimension_numbers = #tpu.dot_dimension_numbers<[1], [0], [0], [1], [0, 0, 1, 1], [], []>} : vector<16x32xf32>, vector<32x8xf32>, vector<16x8xf32> -> vector<16x8xf32>
      %c1_114 = arith.constant 1 : index
      %c2_115 = arith.constant 2 : index
      %c0_116 = arith.constant 0 : index
      %c0_117 = arith.constant 0 : index
      %108 = vector.load %arg7[%c1_114, %c2_115, %c0_116, %c0_117] : memref<3x4x1x8xf32, #tpu.memory_space<vmem>>, vector<1x1x1x8xf32>
      %109 = vector.shape_cast %108 : vector<1x1x1x8xf32> to vector<1x8xf32>
      %110 = vector.broadcast %109 : vector<1x8xf32> to vector<16x8xf32>
      %111 = arith.addf %107, %110 : vector<16x8xf32>
      %c2_118 = arith.constant 2 : index
      %c0_119 = arith.constant 0 : index
      %c0_120 = arith.constant 0 : index
      %112 = vector.load %arg10[%c2_118, %c0_119, %c0_120] : memref<4x16x8xf32, #tpu.memory_space<vmem>>, vector<1x16x8xf32>
      %113 = vector.shape_cast %112 : vector<1x16x8xf32> to vector<16x8xf32>
      %114 = vector.shape_cast %111 : vector<16x8xf32> to vector<1x16x8xf32>
      tpu.vector_store %arg10[%c2_118, %c0_119, %c0_120], %114 {strides = array<i32>} : memref<4x16x8xf32, #tpu.memory_space<vmem>>, vector<1x16x8xf32>,
      %c2_121 = arith.constant 2 : index
      %c2_122 = arith.constant 2 : index
      %c0_123 = arith.constant 0 : index
      %c0_124 = arith.constant 0 : index
      %115 = vector.load %arg5[%c2_121, %c2_122, %c0_123, %c0_124] : memref<3x4x32x8xf32, #tpu.memory_space<vmem>>, vector<1x1x32x8xf32>
      %116 = vector.shape_cast %115 : vector<1x1x32x8xf32> to vector<32x8xf32>
      %cst_125 = arith.constant dense<0.000000e+00> : vector<16x8xf32>
      %117 = tpu.matmul %64, %116, %cst_125 {dimension_numbers = #tpu.dot_dimension_numbers<[1], [0], [0], [1], [0, 0, 1, 1], [], []>} : vector<16x32xf32>, vector<32x8xf32>, vector<16x8xf32> -> vector<16x8xf32>
      %c2_126 = arith.constant 2 : index
      %c2_127 = arith.constant 2 : index
      %c0_128 = arith.constant 0 : index
      %c0_129 = arith.constant 0 : index
      %118 = vector.load %arg7[%c2_126, %c2_127, %c0_128, %c0_129] : memref<3x4x1x8xf32, #tpu.memory_space<vmem>>, vector<1x1x1x8xf32>
      %119 = vector.shape_cast %118 : vector<1x1x1x8xf32> to vector<1x8xf32>
      %120 = vector.broadcast %119 : vector<1x8xf32> to vector<16x8xf32>
      %121 = arith.addf %117, %120 : vector<16x8xf32>
      %c2_130 = arith.constant 2 : index
      %c0_131 = arith.constant 0 : index
      %c0_132 = arith.constant 0 : index
      %122 = vector.load %arg11[%c2_130, %c0_131, %c0_132] : memref<4x16x8xf32, #tpu.memory_space<vmem>>, vector<1x16x8xf32>
      %123 = vector.shape_cast %122 : vector<1x16x8xf32> to vector<16x8xf32>
      %124 = vector.shape_cast %121 : vector<16x8xf32> to vector<1x16x8xf32>
      tpu.vector_store %arg11[%c2_130, %c0_131, %c0_132], %124 {strides = array<i32>} : memref<4x16x8xf32, #tpu.memory_space<vmem>>, vector<1x16x8xf32>,
      %c1_133 = arith.constant 1 : index
      %c3_134 = arith.constant 3 : index
      %c0_135 = arith.constant 0 : index
      %c0_136 = arith.constant 0 : index
      %125 = vector.load %arg5[%c1_133, %c3_134, %c0_135, %c0_136] : memref<3x4x32x8xf32, #tpu.memory_space<vmem>>, vector<1x1x32x8xf32>
      %126 = vector.shape_cast %125 : vector<1x1x32x8xf32> to vector<32x8xf32>
      %cst_137 = arith.constant dense<0.000000e+00> : vector<16x8xf32>
      %127 = tpu.matmul %62, %126, %cst_137 {dimension_numbers = #tpu.dot_dimension_numbers<[1], [0], [0], [1], [0, 0, 1, 1], [], []>} : vector<16x32xf32>, vector<32x8xf32>, vector<16x8xf32> -> vector<16x8xf32>
      %c1_138 = arith.constant 1 : index
      %c3_139 = arith.constant 3 : index
      %c0_140 = arith.constant 0 : index
      %c0_141 = arith.constant 0 : index
      %128 = vector.load %arg7[%c1_138, %c3_139, %c0_140, %c0_141] : memref<3x4x1x8xf32, #tpu.memory_space<vmem>>, vector<1x1x1x8xf32>
      %129 = vector.shape_cast %128 : vector<1x1x1x8xf32> to vector<1x8xf32>
      %130 = vector.broadcast %129 : vector<1x8xf32> to vector<16x8xf32>
      %131 = arith.addf %127, %130 : vector<16x8xf32>
      %c3_142 = arith.constant 3 : index
      %c0_143 = arith.constant 0 : index
      %c0_144 = arith.constant 0 : index
      %132 = vector.load %arg10[%c3_142, %c0_143, %c0_144] : memref<4x16x8xf32, #tpu.memory_space<vmem>>, vector<1x16x8xf32>
      %133 = vector.shape_cast %132 : vector<1x16x8xf32> to vector<16x8xf32>
      %134 = vector.shape_cast %131 : vector<16x8xf32> to vector<1x16x8xf32>
      tpu.vector_store %arg10[%c3_142, %c0_143, %c0_144], %134 {strides = array<i32>} : memref<4x16x8xf32, #tpu.memory_space<vmem>>, vector<1x16x8xf32>,
      %c2_145 = arith.constant 2 : index
      %c3_146 = arith.constant 3 : index
      %c0_147 = arith.constant 0 : index
      %c0_148 = arith.constant 0 : index
      %135 = vector.load %arg5[%c2_145, %c3_146, %c0_147, %c0_148] : memref<3x4x32x8xf32, #tpu.memory_space<vmem>>, vector<1x1x32x8xf32>
      %136 = vector.shape_cast %135 : vector<1x1x32x8xf32> to vector<32x8xf32>
      %cst_149 = arith.constant dense<0.000000e+00> : vector<16x8xf32>
      %137 = tpu.matmul %64, %136, %cst_149 {dimension_numbers = #tpu.dot_dimension_numbers<[1], [0], [0], [1], [0, 0, 1, 1], [], []>} : vector<16x32xf32>, vector<32x8xf32>, vector<16x8xf32> -> vector<16x8xf32>
      %c2_150 = arith.constant 2 : index
      %c3_151 = arith.constant 3 : index
      %c0_152 = arith.constant 0 : index
      %c0_153 = arith.constant 0 : index
      %138 = vector.load %arg7[%c2_150, %c3_151, %c0_152, %c0_153] : memref<3x4x1x8xf32, #tpu.memory_space<vmem>>, vector<1x1x1x8xf32>
      %139 = vector.shape_cast %138 : vector<1x1x1x8xf32> to vector<1x8xf32>
      %140 = vector.broadcast %139 : vector<1x8xf32> to vector<16x8xf32>
      %141 = arith.addf %137, %140 : vector<16x8xf32>
      %c3_154 = arith.constant 3 : index
      %c0_155 = arith.constant 0 : index
      %c0_156 = arith.constant 0 : index
      %142 = vector.load %arg11[%c3_154, %c0_155, %c0_156] : memref<4x16x8xf32, #tpu.memory_space<vmem>>, vector<1x16x8xf32>
      %143 = vector.shape_cast %142 : vector<1x16x8xf32> to vector<16x8xf32>
      %144 = vector.shape_cast %141 : vector<16x8xf32> to vector<1x16x8xf32>
      tpu.vector_store %arg11[%c3_154, %c0_155, %c0_156], %144 {strides = array<i32>} : memref<4x16x8xf32, #tpu.memory_space<vmem>>, vector<1x16x8xf32>,
    } else {
    }
    %c0 = arith.constant 0 : index
    %c0_1 = arith.constant 0 : index
    %c0_2 = arith.constant 0 : index
    %3 = vector.load %arg2[%c0, %c0_1, %c0_2] : memref<1x8x32xf32, #tpu.memory_space<vmem>>, vector<1x8x32xf32>
    %4 = vector.shape_cast %3 : vector<1x8x32xf32> to vector<8x32xf32>
    %c0_3 = arith.constant 0 : index
    %c0_4 = arith.constant 0 : index
    %c0_5 = arith.constant 0 : index
    %c0_6 = arith.constant 0 : index
    %5 = vector.load %arg5[%c0_3, %c0_4, %c0_5, %c0_6] : memref<3x4x32x8xf32, #tpu.memory_space<vmem>>, vector<1x1x32x8xf32>
    %6 = vector.shape_cast %5 : vector<1x1x32x8xf32> to vector<32x8xf32>
    %cst = arith.constant dense<0.000000e+00> : vector<8x8xf32>
    %7 = tpu.matmul %4, %6, %cst {dimension_numbers = #tpu.dot_dimension_numbers<[1], [0], [0], [1], [0, 0, 1, 1], [], []>} : vector<8x32xf32>, vector<32x8xf32>, vector<8x8xf32> -> vector<8x8xf32>
    %c0_7 = arith.constant 0 : index
    %c0_8 = arith.constant 0 : index
    %c0_9 = arith.constant 0 : index
    %c0_10 = arith.constant 0 : index
    %8 = vector.load %arg7[%c0_7, %c0_8, %c0_9, %c0_10] : memref<3x4x1x8xf32, #tpu.memory_space<vmem>>, vector<1x1x1x8xf32>
    %9 = vector.shape_cast %8 : vector<1x1x1x8xf32> to vector<1x8xf32>
    %10 = vector.broadcast %9 : vector<1x8xf32> to vector<8x8xf32>
    %11 = arith.addf %7, %10 : vector<8x8xf32>
    %c0_11 = arith.constant 0 : index
    %c1 = arith.constant 1 : index
    %c0_12 = arith.constant 0 : index
    %c0_13 = arith.constant 0 : index
    %12 = vector.load %arg5[%c0_11, %c1, %c0_12, %c0_13] : memref<3x4x32x8xf32, #tpu.memory_space<vmem>>, vector<1x1x32x8xf32>
    %13 = vector.shape_cast %12 : vector<1x1x32x8xf32> to vector<32x8xf32>
    %cst_14 = arith.constant dense<0.000000e+00> : vector<8x8xf32>
    %14 = tpu.matmul %4, %13, %cst_14 {dimension_numbers = #tpu.dot_dimension_numbers<[1], [0], [0], [1], [0, 0, 1, 1], [], []>} : vector<8x32xf32>, vector<32x8xf32>, vector<8x8xf32> -> vector<8x8xf32>
    %c0_15 = arith.constant 0 : index
    %c1_16 = arith.constant 1 : index
    %c0_17 = arith.constant 0 : index
    %c0_18 = arith.constant 0 : index
    %15 = vector.load %arg7[%c0_15, %c1_16, %c0_17, %c0_18] : memref<3x4x1x8xf32, #tpu.memory_space<vmem>>, vector<1x1x1x8xf32>
    %16 = vector.shape_cast %15 : vector<1x1x1x8xf32> to vector<1x8xf32>
    %17 = vector.broadcast %16 : vector<1x8xf32> to vector<8x8xf32>
    %18 = arith.addf %14, %17 : vector<8x8xf32>
    %c0_19 = arith.constant 0 : index
    %c2 = arith.constant 2 : index
    %c0_20 = arith.constant 0 : index
    %c0_21 = arith.constant 0 : index
    %19 = vector.load %arg5[%c0_19, %c2, %c0_20, %c0_21] : memref<3x4x32x8xf32, #tpu.memory_space<vmem>>, vector<1x1x32x8xf32>
    %20 = vector.shape_cast %19 : vector<1x1x32x8xf32> to vector<32x8xf32>
    %cst_22 = arith.constant dense<0.000000e+00> : vector<8x8xf32>
    %21 = tpu.matmul %4, %20, %cst_22 {dimension_numbers = #tpu.dot_dimension_numbers<[1], [0], [0], [1], [0, 0, 1, 1], [], []>} : vector<8x32xf32>, vector<32x8xf32>, vector<8x8xf32> -> vector<8x8xf32>
    %c0_23 = arith.constant 0 : index
    %c2_24 = arith.constant 2 : index
    %c0_25 = arith.constant 0 : index
    %c0_26 = arith.constant 0 : index
    %22 = vector.load %arg7[%c0_23, %c2_24, %c0_25, %c0_26] : memref<3x4x1x8xf32, #tpu.memory_space<vmem>>, vector<1x1x1x8xf32>
    %23 = vector.shape_cast %22 : vector<1x1x1x8xf32> to vector<1x8xf32>
    %24 = vector.broadcast %23 : vector<1x8xf32> to vector<8x8xf32>
    %25 = arith.addf %21, %24 : vector<8x8xf32>
    %c0_27 = arith.constant 0 : index
    %c3 = arith.constant 3 : index
    %c0_28 = arith.constant 0 : index
    %c0_29 = arith.constant 0 : index
    %26 = vector.load %arg5[%c0_27, %c3, %c0_28, %c0_29] : memref<3x4x32x8xf32, #tpu.memory_space<vmem>>, vector<1x1x32x8xf32>
    %27 = vector.shape_cast %26 : vector<1x1x32x8xf32> to vector<32x8xf32>
    %cst_30 = arith.constant dense<0.000000e+00> : vector<8x8xf32>
    %28 = tpu.matmul %4, %27, %cst_30 {dimension_numbers = #tpu.dot_dimension_numbers<[1], [0], [0], [1], [0, 0, 1, 1], [], []>} : vector<8x32xf32>, vector<32x8xf32>, vector<8x8xf32> -> vector<8x8xf32>
    %c0_31 = arith.constant 0 : index
    %c3_32 = arith.constant 3 : index
    %c0_33 = arith.constant 0 : index
    %c0_34 = arith.constant 0 : index
    %29 = vector.load %arg7[%c0_31, %c3_32, %c0_33, %c0_34] : memref<3x4x1x8xf32, #tpu.memory_space<vmem>>, vector<1x1x1x8xf32>
    %30 = vector.shape_cast %29 : vector<1x1x1x8xf32> to vector<1x8xf32>
    %31 = vector.broadcast %30 : vector<1x8xf32> to vector<8x8xf32>
    %32 = arith.addf %28, %31 : vector<8x8xf32>
    %33 = vector.shape_cast %11 : vector<8x8xf32> to vector<1x8x8xf32>
    %34 = vector.shape_cast %18 : vector<8x8xf32> to vector<1x8x8xf32>
    %35 = vector.shape_cast %25 : vector<8x8xf32> to vector<1x8x8xf32>
    %36 = vector.shape_cast %32 : vector<8x8xf32> to vector<1x8x8xf32>
    %37 = tpu.concatenate %33, %34, %35, %36 in 0 : vector<1x8x8xf32>, vector<1x8x8xf32>, vector<1x8x8xf32>, vector<1x8x8xf32> -> vector<4x8x8xf32>
    %c0_35 = arith.constant 0 : index
    %c0_36 = arith.constant 0 : index
    %c0_37 = arith.constant 0 : index
    %38 = vector.load %arg10[%c0_35, %c0_36, %c0_37] : memref<4x16x8xf32, #tpu.memory_space<vmem>>, vector<4x16x8xf32>
    "tpu.trace_start"() <{level = 10 : i32, message = "hqf,hkf->hqk"}> : () -> ()
    %cst_38 = arith.constant dense<0.000000e+00> : vector<4x8x16xf32>
    %39 = tpu.matmul %37, %38, %cst_38 {dimension_numbers = #tpu.dot_dimension_numbers<[2], [2], [1], [1], [0, 0, 0, 1, 1, 1], [0], [0]>} : vector<4x8x8xf32>, vector<4x16x8xf32>, vector<4x8x16xf32> -> vector<4x8x16xf32>
    "tpu.trace_stop"() : () -> ()
    %cst_39 = arith.constant dense<0xFF800000> : vector<4x8xf32>
    %40 = vector.multi_reduction <maximumf>, %39, %cst_39 [2] : vector<4x8x16xf32> to vector<4x8xf32>
    %41 = vector.shape_cast %40 : vector<4x8xf32> to vector<4x8x1xf32>
    %42 = vector.broadcast %41 : vector<4x8x1xf32> to vector<4x8x16xf32>
    %43 = arith.subf %39, %42 : vector<4x8x16xf32>
    %44 = math.exp %43 : vector<4x8x16xf32>
    %cst_40 = arith.constant dense<0.000000e+00> : vector<4x8xf32>
    %45 = vector.multi_reduction <add>, %44, %cst_40 [2] : vector<4x8x16xf32> to vector<4x8xf32>
    %46 = vector.shape_cast %45 : vector<4x8xf32> to vector<4x8x1xf32>
    %c0_41 = arith.constant 0 : index
    %c0_42 = arith.constant 0 : index
    %c0_43 = arith.constant 0 : index
    %47 = vector.load %arg11[%c0_41, %c0_42, %c0_43] : memref<4x16x8xf32, #tpu.memory_space<vmem>>, vector<4x16x8xf32>
    "tpu.trace_start"() <{level = 10 : i32, message = "hqk,hkf->hqf"}> : () -> ()
    %cst_44 = arith.constant dense<0.000000e+00> : vector<4x8x8xf32>
    %48 = tpu.matmul %44, %47, %cst_44 {dimension_numbers = #tpu.dot_dimension_numbers<[2], [1], [1], [2], [0, 0, 0, 1, 1, 2], [0], [0]>} : vector<4x8x16xf32>, vector<4x16x8xf32>, vector<4x8x8xf32> -> vector<4x8x8xf32>
    "tpu.trace_stop"() : () -> ()
    %49 = tpu.reciprocal %46 : vector<4x8x1xf32> -> vector<4x8x1xf32>
    %50 = vector.broadcast %49 : vector<4x8x1xf32> to vector<4x8x8xf32>
    %51 = arith.mulf %48, %50 : vector<4x8x8xf32>
    %c0_45 = arith.constant 0 : index
    %c0_46 = arith.constant 0 : index
    %c0_47 = arith.constant 0 : index
    %52 = vector.load %arg6[%c0_45, %c0_46, %c0_47] : memref<4x8x32xf32, #tpu.memory_space<vmem>>, vector<4x8x32xf32>
    "tpu.trace_start"() <{level = 10 : i32, message = "hqf,hfD->hqD"}> : () -> ()
    %cst_48 = arith.constant dense<0.000000e+00> : vector<4x8x32xf32>
    %53 = tpu.matmul %51, %52, %cst_48 {dimension_numbers = #tpu.dot_dimension_numbers<[2], [1], [1], [2], [0, 0, 0, 1, 1, 2], [0], [0]>} : vector<4x8x8xf32>, vector<4x8x32xf32>, vector<4x8x32xf32> -> vector<4x8x32xf32>
    "tpu.trace_stop"() : () -> ()
    %cst_49 = arith.constant dense<0.000000e+00> : vector<8x32xf32>
    %54 = vector.multi_reduction <add>, %53, %cst_49 [0] : vector<4x8x32xf32> to vector<8x32xf32>
    %c0_50 = arith.constant 0 : index
    %c0_51 = arith.constant 0 : index
    %55 = vector.load %arg8[%c0_50, %c0_51] : memref<1x32xf32, #tpu.memory_space<vmem>>, vector<1x32xf32>
    %56 = vector.broadcast %55 : vector<1x32xf32> to vector<8x32xf32>
    %57 = arith.addf %54, %56 : vector<8x32xf32>
    %c0_52 = arith.constant 0 : index
    %c0_53 = arith.constant 0 : index
    %c0_54 = arith.constant 0 : index
    %58 = vector.load %arg9[%c0_52, %c0_53, %c0_54] : memref<1x8x32xf32, #tpu.memory_space<vmem>>, vector<1x8x32xf32>
    %59 = vector.shape_cast %58 : vector<1x8x32xf32> to vector<8x32xf32>
    %60 = vector.shape_cast %57 : vector<8x32xf32> to vector<1x8x32xf32>
    tpu.vector_store %arg9[%c0_52, %c0_53, %c0_54], %60 {strides = array<i32>} : memref<1x8x32xf32, #tpu.memory_space<vmem>>, vector<1x8x32xf32>,
    return
  }
  func.func @transform_0(%arg0: i32, %arg1: i32) -> (i32, i32, i32) {
    %c0_i32 = arith.constant 0 : i32
    %c0_i32_0 = arith.constant 0 : i32
    return %arg0, %arg1, %c0_i32 : i32, i32, i32
  }
  func.func @transform_1(%arg0: i32, %arg1: i32) -> (i32, i32, i32) {
    %c0_i32 = arith.constant 0 : i32
    %c0_i32_0 = arith.constant 0 : i32
    %c0_i32_1 = arith.constant 0 : i32
    return %arg0, %c0_i32, %c0_i32_0 : i32, i32, i32
  }
  func.func @transform_2(%arg0: i32, %arg1: i32) -> (i32, i32, i32) {
    %c0_i32 = arith.constant 0 : i32
    %c0_i32_0 = arith.constant 0 : i32
    %c0_i32_1 = arith.constant 0 : i32
    return %arg0, %c0_i32, %c0_i32_0 : i32, i32, i32
  }
  func.func @transform_3(%arg0: i32, %arg1: i32) -> (i32, i32, i32, i32) {
    %c0_i32 = arith.constant 0 : i32
    %c0_i32_0 = arith.constant 0 : i32
    %c0_i32_1 = arith.constant 0 : i32
    %c0_i32_2 = arith.constant 0 : i32
    %c0_i32_3 = arith.constant 0 : i32
    return %c0_i32, %c0_i32_0, %c0_i32_1, %c0_i32_2 : i32, i32, i32, i32
  }
  func.func @transform_4(%arg0: i32, %arg1: i32) -> (i32, i32, i32) {
    %c0_i32 = arith.constant 0 : i32
    %c0_i32_0 = arith.constant 0 : i32
    %c0_i32_1 = arith.constant 0 : i32
    %c0_i32_2 = arith.constant 0 : i32
    return %c0_i32, %c0_i32_0, %c0_i32_1 : i32, i32, i32
  }
  func.func @transform_5(%arg0: i32, %arg1: i32) -> (i32, i32, i32, i32) {
    %c0_i32 = arith.constant 0 : i32
    %c0_i32_0 = arith.constant 0 : i32
    %c0_i32_1 = arith.constant 0 : i32
    %c0_i32_2 = arith.constant 0 : i32
    %c0_i32_3 = arith.constant 0 : i32
    return %c0_i32, %c0_i32_0, %c0_i32_1, %c0_i32_2 : i32, i32, i32, i32
  }
  func.func @transform_6(%arg0: i32, %arg1: i32) -> (i32, i32) {
    %c0_i32 = arith.constant 0 : i32
    %c0_i32_0 = arith.constant 0 : i32
    %c0_i32_1 = arith.constant 0 : i32
    return %c0_i32, %c0_i32_0 : i32, i32
  }
  func.func @transform_7(%arg0: i32, %arg1: i32) -> (i32, i32, i32) {
    %c0_i32 = arith.constant 0 : i32
    %c0_i32_0 = arith.constant 0 : i32
    return %arg0, %arg1, %c0_i32 : i32, i32, i32
  }
}

</mosaic_0001>

<llo_original>
// kernel: tpu_custom_call.1
$region0: #{tpu_custom_call.1}
  #allocation0 [shape = 'u32[]', space=smem, size = 0x4, offset = 0x4, fixed_abs, tag = 'smem constant byte address 0x4 - core index']
  #allocation1 [shape = 'u32[144,128]{1,0:T(1,128)}', space=vmem, size = 0x12000, scoped, tag = 'internal scratch']
  #allocation2 [shape = 'f32[4,16,8]{2,1,0:T(8,128)}', space=vmem, size = 0x8000, scoped, tag = 'scratch operand']
  #allocation3 [shape = 'f32[4,16,8]{2,1,0:T(8,128)}', space=vmem, size = 0x8000, scoped, tag = 'scratch operand']
  %s0 = inlined_call_operand.vmem [shape: f32[2,16,32], index: 0, kind: input, shape index: {}]
  %s1 = inlined_call_operand.vmem [shape: f32[2,16,32], index: 1, kind: input, shape index: {}]
  %s2 = inlined_call_operand.vmem [shape: f32[2,16,32], index: 2, kind: input, shape index: {}]
  %s3 = inlined_call_operand.vmem [shape: f32[3,4,32,8], index: 3, kind: input, shape index: {}]
  %s4 = inlined_call_operand.vmem [shape: f32[4,8,32], index: 4, kind: input, shape index: {}]
  %s5 = inlined_call_operand.vmem [shape: f32[3,4,1,8], index: 5, kind: input, shape index: {}]
  %s6 = inlined_call_operand.vmem [shape: f32[1,32], index: 6, kind: input, shape index: {}]
  %s7 = inlined_call_operand.hbm [shape: f32[2,16,32], index: 7, kind: output, shape index: {}]
  %s8 = sld [smem:[#allocation0]]
  $region65: #{tpu_custom_call.1} parent=0
    _
  %s10 = ssub.s32 1, %s8
  %s11 = scalar_select 0, %s10, %s8
  $region1: #{tpu_custom_call.1} parent=0
    #allocation4 [shape = 'u8[8192]{0}', space=vmem, size = 0x2000, scoped, tag = 'output window, operand 0']
    #allocation5 [shape = 's32[2]{0}', space=sflag, size = 0x8, scoped, tag = 'scoped memory for tpu_custom_call.1']
    %12 = vsyncpa [#allocation5], 0
    %s13 = scalar_lea.sflag [#allocation5], 1
    %14 = vsyncpa %s13, 0
    loop: start=0, step=1, limit=6
    $region2: #{tpu_custom_call.1} parent=1 // loop_pre_header
      _
    $region3: #{tpu_custom_call.1} parent=1 // loop_header
      %s16 = sphi 0, %s20
      %p17 = scmp.ge.s32.totalorder %s16, 6
      %s23 = sphi 0, %s35
      %s24 = sphi 0, %s31
      %s25 = sphi 0, %s23
      %s26 = sphi 0, %s24
      %s27 = sphi 0, %s25
      %s28 = sphi 0, %s26
      %s40 = sphi 0, %s42
      %s43 = sphi 0, %s40
      %s44 = sphi 0, %s43
      %s60 = sphi 0, %s44
      %s66 = sphi 0, %s68
      %s69 = sphi 0, %s66
      %s70 = sphi 0, %s69
      %s86 = sphi 0, %s70
      %s92 = sphi 0, %s94
      %s95 = sphi 0, %s92
      %s96 = sphi 0, %s95
      %s112 = sphi 0, %s96
      %s116 = sphi 0, %s116
      %s118 = sphi 0, %s116
      %s119 = sphi 0, %s118
      %s133 = sphi 0, %s119
      %s137 = sphi 0, %s137
      %s139 = sphi 0, %s137
      %s140 = sphi 0, %s139
      %s154 = sphi 0, %s140
      %s158 = sphi 0, %s158
      %s160 = sphi 0, %s158
      %s161 = sphi 0, %s160
      %s175 = sphi 0, %s161
      %s179 = sphi 0, %s179
      %s181 = sphi 0, %s179
      %s182 = sphi 0, %s181
      %s196 = sphi 0, %s182
      %s204 = sphi 0, %s206
      %s207 = sphi 0, %s204
      %s208 = sphi 0, %s207
      %s224 = sphi 0, %s208
    $region4: #{tpu_custom_call.1} parent=1 // loop_header_branch
      %19 = sbr.rel (%p17) target = $region8
    $region5: #{tpu_custom_call.1} parent=1 // loop_body
      %s21 = ssub.s32 %s16, 1
      %s22 = ssub.s32 %s16, 2
      %s29 = sadd.s32 1, %s24
      %p30 = scmp.ge.s32.totalorder %s29, 2
      %s31 = scalar_select %p30, 0, %s29
      %s32 = sadd.s32 1, %s23
      %s33 = scalar_select %p30, %s32, %s23
      %p34 = scmp.ge.s32.totalorder %s33, 2
      %s35 = scalar_select %p34, 0, %s33
      %s36 = ssub.s32 %s23, %s35
      %s37 = ssub.s32 %s24, %s31
      %s38 = sor.u32 %s36, %s37
      %p39 = scmp.eq.s32.totalorder %s38, 0
      %s41 = sadd.s32 %s40, 1
      %s42 = scalar_select %p39, %s40, %s41
      %p45 = pneg %p39
      %p46 = scmp.eq.s32.totalorder %s16, 3
      %p47 = por %p45, %p46
      %p48 = scmp.ne.s32.totalorder %s40, %s43
      %p49 = scmp.eq.s32.totalorder %s16, 0
      %p50 = por %p48, %p49
      %p51 = scmp.ne.s32.totalorder %s40, %s43
      %p52 = scmp.eq.s32.totalorder %s21, 3
      %p53 = por %p51, %p52
      %p54 = scmp.ne.s32.totalorder %s43, %s44
      %p55 = scmp.eq.s32.totalorder %s21, 0
      %p56 = por %p54, %p55
      %p57 = scmp.ne.s32.totalorder %s43, %s44
      %p58 = scmp.eq.s32.totalorder %s22, 3
      %p59 = por %p57, %p58
      %p61 = scmp.ne.s32.totalorder %s44, %s60
      %p62 = scmp.eq.s32.totalorder %s22, 0
      %p63 = por %p61, %p62
      %s64 = ssub.s32 %s23, %s35
      %p65 = scmp.eq.s32.totalorder %s64, 0
      %s67 = sadd.s32 %s66, 1
      %s68 = scalar_select %p65, %s66, %s67
      %p71 = pneg %p65
      %p72 = scmp.eq.s32.totalorder %s16, 3
      %p73 = por %p71, %p72
      %p74 = scmp.ne.s32.totalorder %s66, %s69
      %p75 = scmp.eq.s32.totalorder %s16, 0
      %p76 = por %p74, %p75
      %p77 = scmp.ne.s32.totalorder %s66, %s69
      %p78 = scmp.eq.s32.totalorder %s21, 3
      %p79 = por %p77, %p78
      %p80 = scmp.ne.s32.totalorder %s69, %s70
      %p81 = scmp.eq.s32.totalorder %s21, 0
      %p82 = por %p80, %p81
      %p83 = scmp.ne.s32.totalorder %s69, %s70
      %p84 = scmp.eq.s32.totalorder %s22, 3
      %p85 = por %p83, %p84
      %p87 = scmp.ne.s32.totalorder %s70, %s86
      %p88 = scmp.eq.s32.totalorder %s22, 0
      %p89 = por %p87, %p88
      %s90 = ssub.s32 %s23, %s35
      %p91 = scmp.eq.s32.totalorder %s90, 0
      %s93 = sadd.s32 %s92, 1
      %s94 = scalar_select %p91, %s92, %s93
      %p97 = pneg %p91
      %p98 = scmp.eq.s32.totalorder %s16, 3
      %p99 = por %p97, %p98
      %p100 = scmp.ne.s32.totalorder %s92, %s95
      %p101 = scmp.eq.s32.totalorder %s16, 0
      %p102 = por %p100, %p101
      %p103 = scmp.ne.s32.totalorder %s92, %s95
      %p104 = scmp.eq.s32.totalorder %s21, 3
      %p105 = por %p103, %p104
      %p106 = scmp.ne.s32.totalorder %s95, %s96
      %p107 = scmp.eq.s32.totalorder %s21, 0
      %p108 = por %p106, %p107
      %p109 = scmp.ne.s32.totalorder %s95, %s96
      %p110 = scmp.eq.s32.totalorder %s22, 3
      %p111 = por %p109, %p110
      %p113 = scmp.ne.s32.totalorder %s96, %s112
      %p114 = scmp.eq.s32.totalorder %s22, 0
      %p115 = por %p113, %p114
      %s117 = sadd.s32 %s116, 1
      %p120 = scmp.eq.s32.totalorder %s16, 3
      %p121 = scmp.ne.s32.totalorder %s116, %s118
      %p122 = scmp.eq.s32.totalorder %s16, 0
      %p123 = por %p121, %p122
      %p124 = scmp.ne.s32.totalorder %s116, %s118
      %p125 = scmp.eq.s32.totalorder %s21, 3
      %p126 = por %p124, %p125
      %p127 = scmp.ne.s32.totalorder %s118, %s119
      %p128 = scmp.eq.s32.totalorder %s21, 0
      %p129 = por %p127, %p128
      %p130 = scmp.ne.s32.totalorder %s118, %s119
      %p131 = scmp.eq.s32.totalorder %s22, 3
      %p132 = por %p130, %p131
      %p134 = scmp.ne.s32.totalorder %s119, %s133
      %p135 = scmp.eq.s32.totalorder %s22, 0
      %p136 = por %p134, %p135
      %s138 = sadd.s32 %s137, 1
      %p141 = scmp.eq.s32.totalorder %s16, 3
      %p142 = scmp.ne.s32.totalorder %s137, %s139
      %p143 = scmp.eq.s32.totalorder %s16, 0
      %p144 = por %p142, %p143
      %p145 = scmp.ne.s32.totalorder %s137, %s139
      %p146 = scmp.eq.s32.totalorder %s21, 3
      %p147 = por %p145, %p146
      %p148 = scmp.ne.s32.totalorder %s139, %s140
      %p149 = scmp.eq.s32.totalorder %s21, 0
      %p150 = por %p148, %p149
      %p151 = scmp.ne.s32.totalorder %s139, %s140
      %p152 = scmp.eq.s32.totalorder %s22, 3
      %p153 = por %p151, %p152
      %p155 = scmp.ne.s32.totalorder %s140, %s154
      %p156 = scmp.eq.s32.totalorder %s22, 0
      %p157 = por %p155, %p156
      %s159 = sadd.s32 %s158, 1
      %p162 = scmp.eq.s32.totalorder %s16, 3
      %p163 = scmp.ne.s32.totalorder %s158, %s160
      %p164 = scmp.eq.s32.totalorder %s16, 0
      %p165 = por %p163, %p164
      %p166 = scmp.ne.s32.totalorder %s158, %s160
      %p167 = scmp.eq.s32.totalorder %s21, 3
      %p168 = por %p166, %p167
      %p169 = scmp.ne.s32.totalorder %s160, %s161
      %p170 = scmp.eq.s32.totalorder %s21, 0
      %p171 = por %p169, %p170
      %p172 = scmp.ne.s32.totalorder %s160, %s161
      %p173 = scmp.eq.s32.totalorder %s22, 3
      %p174 = por %p172, %p173
      %p176 = scmp.ne.s32.totalorder %s161, %s175
      %p177 = scmp.eq.s32.totalorder %s22, 0
      %p178 = por %p176, %p177
      %s180 = sadd.s32 %s179, 1
      %p183 = scmp.eq.s32.totalorder %s16, 3
      %p184 = scmp.ne.s32.totalorder %s179, %s181
      %p185 = scmp.eq.s32.totalorder %s16, 0
      %p186 = por %p184, %p185
      %p187 = scmp.ne.s32.totalorder %s179, %s181
      %p188 = scmp.eq.s32.totalorder %s21, 3
      %p189 = por %p187, %p188
      %p190 = scmp.ne.s32.totalorder %s181, %s182
      %p191 = scmp.eq.s32.totalorder %s21, 0
      %p192 = por %p190, %p191
      %p193 = scmp.ne.s32.totalorder %s181, %s182
      %p194 = scmp.eq.s32.totalorder %s22, 3
      %p195 = por %p193, %p194
      %p197 = scmp.ne.s32.totalorder %s182, %s196
      %p198 = scmp.eq.s32.totalorder %s22, 0
      %p199 = por %p197, %p198
      %s200 = ssub.s32 %s23, %s35
      %s201 = ssub.s32 %s24, %s31
      %s202 = sor.u32 %s200, %s201
      %p203 = scmp.eq.s32.totalorder %s202, 0
      %s205 = sadd.s32 %s204, 1
      %s206 = scalar_select %p203, %s204, %s205
      %p209 = pneg %p203
      %p210 = scmp.eq.s32.totalorder %s16, 3
      %p211 = por %p209, %p210
      %p212 = scmp.ne.s32.totalorder %s204, %s207
      %p213 = scmp.eq.s32.totalorder %s16, 0
      %p214 = por %p212, %p213
      %p215 = scmp.ne.s32.totalorder %s204, %s207
      %p216 = scmp.eq.s32.totalorder %s21, 3
      %p217 = por %p215, %p216
      %p218 = scmp.ne.s32.totalorder %s207, %s208
      %p219 = scmp.eq.s32.totalorder %s21, 0
      %p220 = por %p218, %p219
      %p221 = scmp.ne.s32.totalorder %s207, %s208
      %p222 = scmp.eq.s32.totalorder %s22, 3
      %p223 = por %p221, %p222
      %p225 = scmp.ne.s32.totalorder %s208, %s224
      %p226 = scmp.eq.s32.totalorder %s22, 0
      %p227 = por %p225, %p226
      %p228 = scmp.le.s32.totalorder 1, %s16
      %p229 = scmp.lt.s32.totalorder %s16, 5
      %p230 = pnand %p228, %p229
      %p231 = pneg %p230
      // Predicated region
      $region9: #{tpu_custom_call.1} parent=5 // pred_check
        _
      $region10: #{tpu_custom_call.1} parent=5 // pred_check_branch
        %233 = sbr.rel (%p230) target = $region12
      $region11: #{tpu_custom_call.1} parent=5 // pred_region
        %s234 = ssub.s32 %s16, 1
        // Predicated region
        $region13: #{tpu_custom_call.1} parent=11 // pred_check
          %p235 = pneg %p129
        $region14: #{tpu_custom_call.1} parent=11 // pred_check_branch
          %237 = sbr.rel (%p235) target = $region16
        $region15: #{tpu_custom_call.1} parent=11 // pred_region
          _
        $region16: #{tpu_custom_call.1} parent=11 // pred_fallthru
          _
        // Predicated region
        $region17: #{tpu_custom_call.1} parent=11 // pred_check
          %p238 = pneg %p150
        $region18: #{tpu_custom_call.1} parent=11 // pred_check_branch
          %240 = sbr.rel (%p238) target = $region20
        $region19: #{tpu_custom_call.1} parent=11 // pred_region
          _
        $region20: #{tpu_custom_call.1} parent=11 // pred_fallthru
          _
        // Predicated region
        $region21: #{tpu_custom_call.1} parent=11 // pred_check
          %p241 = pneg %p171
        $region22: #{tpu_custom_call.1} parent=11 // pred_check_branch
          %243 = sbr.rel (%p241) target = $region24
        $region23: #{tpu_custom_call.1} parent=11 // pred_region
          _
        $region24: #{tpu_custom_call.1} parent=11 // pred_fallthru
          _
        // Predicated region
        $region25: #{tpu_custom_call.1} parent=11 // pred_check
          %p244 = pneg %p192
        $region26: #{tpu_custom_call.1} parent=11 // pred_check_branch
          %246 = sbr.rel (%p244) target = $region28
        $region27: #{tpu_custom_call.1} parent=11 // pred_region
          _
        $region28: #{tpu_custom_call.1} parent=11 // pred_fallthru
          _
      $region12: #{tpu_custom_call.1} parent=5 // pred_fallthru
        _
      %p247 = scmp.lt.s32.totalorder %s16, 4
      // Predicated region
      $region29: #{tpu_custom_call.1} parent=5 // pred_check
        %p248 = pneg %p247
      $region30: #{tpu_custom_call.1} parent=5 // pred_check_branch
        %250 = sbr.rel (%p248) target = $region32
      $region31: #{tpu_custom_call.1} parent=5 // pred_region
        // Predicated region
        $region33: #{tpu_custom_call.1} parent=31 // pred_check
          %p251 = pneg %p50
        $region34: #{tpu_custom_call.1} parent=31 // pred_check_branch
          %253 = sbr.rel (%p251) target = $region36
        $region35: #{tpu_custom_call.1} parent=31 // pred_region
          %p254 = scmp.lt.s32.totalorder %s23, 1
          %s255 = scalar_select %p254, %s23, 1
          %p256 = scmp.lt.s32.totalorder %s24, 1
          %s257 = scalar_select %p256, %s24, 1
          %s258 = smul.addr %s255, 2
          %s259 = sadd.s32 %s257, %s258
          %s260 = smul.addr %s259, 8
          %s261 = scalar_lea.vmem %s0, %s260
        $region36: #{tpu_custom_call.1} parent=31 // pred_fallthru
          _
        // Predicated region
        $region37: #{tpu_custom_call.1} parent=31 // pred_check
          %p262 = pneg %p76
        $region38: #{tpu_custom_call.1} parent=31 // pred_check_branch
          %264 = sbr.rel (%p262) target = $region40
        $region39: #{tpu_custom_call.1} parent=31 // pred_region
          %p265 = scmp.lt.s32.totalorder %s23, 1
          %s266 = scalar_select %p265, %s23, 1
          %s267 = smul.addr %s266, 2
          %s268 = smul.addr %s267, 8
          %s269 = scalar_lea.vmem %s1, %s268
        $region40: #{tpu_custom_call.1} parent=31 // pred_fallthru
          _
        // Predicated region
        $region41: #{tpu_custom_call.1} parent=31 // pred_check
          %p270 = pneg %p102
        $region42: #{tpu_custom_call.1} parent=31 // pred_check_branch
          %272 = sbr.rel (%p270) target = $region44
        $region43: #{tpu_custom_call.1} parent=31 // pred_region
          %p273 = scmp.lt.s32.totalorder %s23, 1
          %s274 = scalar_select %p273, %s23, 1
          %s275 = smul.addr %s274, 2
          %s276 = smul.addr %s275, 8
          %s277 = scalar_lea.vmem %s2, %s276
        $region44: #{tpu_custom_call.1} parent=31 // pred_fallthru
          _
      $region32: #{tpu_custom_call.1} parent=5 // pred_fallthru
        _
      %p278 = scmp.le.s32.totalorder 1, %s16
      %p279 = scmp.lt.s32.totalorder %s16, 5
      %p280 = pnand %p278, %p279
      %p281 = pneg %p280
      // Predicated region
      $region45: #{tpu_custom_call.1} parent=5 // pred_check
        _
      $region46: #{tpu_custom_call.1} parent=5 // pred_check_branch
        %283 = sbr.rel (%p280) target = $region48
      $region47: #{tpu_custom_call.1} parent=5 // pred_region
        %s284 = ssub.s32 %s16, 1
        %p285 = scmp.lt.s32.totalorder %s25, 1
        %s286 = scalar_select %p285, %s25, 1
        %p287 = scmp.lt.s32.totalorder %s26, 1
        %s288 = scalar_select %p287, %s26, 1
        %s289 = smul.addr %s286, 2
        %s290 = sadd.s32 %s288, %s289
        %s291 = smul.addr %s290, 8
        %s292 = scalar_lea.vmem %s0, %s291
        %p293 = pneg %p56
        %p294 = pneg %p53
        %p295 = scmp.lt.s32.totalorder %s25, 1
        %s296 = scalar_select %p295, %s25, 1
        %s297 = smul.addr %s296, 2
        %s298 = smul.addr %s297, 8
        %s299 = scalar_lea.vmem %s1, %s298
        %p300 = pneg %p82
        %p301 = pneg %p79
        %p302 = scmp.lt.s32.totalorder %s25, 1
        %s303 = scalar_select %p302, %s25, 1
        %s304 = smul.addr %s303, 2
        %s305 = smul.addr %s304, 8
        %s306 = scalar_lea.vmem %s2, %s305
        %p307 = pneg %p108
        %p308 = pneg %p105
        %p309 = pneg %p129
        %p310 = pneg %p126
        %p311 = pneg %p150
        %p312 = pneg %p147
        %p313 = pneg %p171
        %p314 = pneg %p168
        %p315 = pneg %p192
        %p316 = pneg %p189
        %p317 = pneg %p220
        %p318 = pneg %p217
        %s319 = sand.u32 %s207, 1
        %s320 = scalar_lea.sflag [#allocation5], %s319
        %s321 = sand.u32 %s207, 1
        %s322 = smul.addr %s321, 8
        %s323 = scalar_lea.vmem [#allocation4], %s322
        %p324 = scmp.lt.s32.totalorder %s25, 1
        %s325 = scalar_select %p324, %s25, 1
        %p326 = scmp.lt.s32.totalorder %s26, 1
        %s327 = scalar_select %p326, %s26, 1
        %s328 = smul.addr %s325, 2
        %s329 = sadd.s32 %s327, %s328
        %s330 = smul.addr %s329, 8
        %s331 = scalar_lea.vmem %s0, %s330
        %p332 = scmp.lt.s32.totalorder %s25, 1
        %s333 = scalar_select %p332, %s25, 1
        %s334 = smul.addr %s333, 2
        %s335 = smul.addr %s334, 8
        %s336 = scalar_lea.vmem %s1, %s335
        %p337 = scmp.lt.s32.totalorder %s25, 1
        %s338 = scalar_select %p337, %s25, 1
        %s339 = smul.addr %s338, 2
        %s340 = smul.addr %s339, 8
        %s341 = scalar_lea.vmem %s2, %s340
        %p342 = scmp.eq.s32.totalorder %s26, 0
        // Predicated region
        $region49: #{tpu_custom_call.1} parent=47 // pred_check
          %p343 = pneg %p342
        $region50: #{tpu_custom_call.1} parent=47 // pred_check_branch
          %345 = sbr.rel (%p343) target = $region52
        $region51: #{tpu_custom_call.1} parent=47 // pred_region
          %v346 = vld [vmem:[%s336] sm:$0xff]
          %v347 = vld [vmem:[%s336 + $0x8] sm:$0xff]
          %v348 = vld [vmem:[%s341] sm:$0xff]
          %v349 = vld [vmem:[%s341 + $0x8] sm:$0xff]
          %s350 = scalar_lea.vmem %s3, 128
          %v351 = vld [vmem:[%s350] sm:$0xff]
          %v352 = vld [vmem:[%s350 + $0x8] sm:$0xff]
          %v353 = vld [vmem:[%s350 + $0x10] sm:$0xff]
          %v354 = vld [vmem:[%s350 + $0x18] sm:$0xff]
          %s355 = scalar_lea.vmem %s5, 4
          %v356 = vld [vmem:[%s355] sm:$0x1]
          %v358 = vlaneseq
          %v359 = vshrl.u32 %v358, 7
          %v360 = vsub.s32 0, %v359
          %v361 = vrot.slane %v356, %v360
          %vm363 = vcmask 261120
          %v365 = vsel %vm363, %v346, 0
          %v368 = vsel %vm363, %v347, 0
          %370 = vmatprep.subr.mxu0 0.0
          %371 = vmatpush1.msra.mxu0 0.0
          %372 = vmatprep.subr.mxu0 0.0
          %373 = vmatpush1.msra.mxu0 0.0
          %374 = vmatprep.subr.mxu0 0.0
          %375 = vmatpush1.msra.mxu0 0.0
          %376 = vmatprep.subr.mxu0 0.0
          %377 = vmatpush1.msra.mxu0 0.0
          %378 = vmatprep.subr.mxu0 0.0
          %379 = vmatpush1.msra.mxu0 0.0
          %380 = vmatprep.subr.mxu0 0.0
          %381 = vmatpush1.msra.mxu0 0.0
          %382 = vmatprep.subr.mxu0 0.0
          %383 = vmatpush1.msra.mxu0 0.0
          %384 = vmatprep.subr.mxu0 0.0
          %385 = vmatpush1.msra.mxu0 0.0
          %386 = vmatprep.subr.mxu0 0.0
          %387 = vmatpush1.msra.mxu0 0.0
          %388 = vmatprep.subr.mxu0 0.0
          %389 = vmatpush1.msra.mxu0 0.0
          %390 = vmatprep.subr.mxu0 0.0
          %391 = vmatpush1.msra.mxu0 0.0
          %392 = vmatprep.subr.mxu0 0.0
          %393 = vmatpush1.msra.mxu0 0.0
          %394 = vmatprep.subr.mxu0 0.0
          %395 = vmatpush1.msra.mxu0 %v354
          %396 = vmatprep.subr.mxu0 0.0
          %397 = vmatpush1.msra.mxu0 %v353
          %398 = vmatprep.subr.mxu0 0.0
          %399 = vmatpush1.msra.mxu0 %v352
          %400 = vmatprep.subr.mxu0 0.0
          %401 = vmatpush1.msra.mxu0 %v351
          %402 = vmatprep.subr.mxu0 0.0
          %403 = vmatpush2.msra.mxu0 0.0
          %404 = vmatprep.subr.mxu0 0.0
          %405 = vmatpush2.msra.mxu0 0.0
          %406 = vmatprep.subr.mxu0 0.0
          %407 = vmatpush2.msra.mxu0 0.0
          %408 = vmatprep.subr.mxu0 0.0
          %409 = vmatpush2.msra.mxu0 0.0
          %410 = vmatprep.subr.mxu0 0.0
          %411 = vmatpush2.msra.mxu0 0.0
          %412 = vmatprep.subr.mxu0 0.0
          %413 = vmatpush2.msra.mxu0 0.0
          %414 = vmatprep.subr.mxu0 0.0
          %415 = vmatpush2.msra.mxu0 0.0
          %416 = vmatprep.subr.mxu0 0.0
          %417 = vmatpush2.msra.mxu0 0.0
          %418 = vmatprep.subr.mxu0 0.0
          %419 = vmatpush2.msra.mxu0 0.0
          %420 = vmatprep.subr.mxu0 0.0
          %421 = vmatpush2.msra.mxu0 0.0
          %422 = vmatprep.subr.mxu0 0.0
          %423 = vmatpush2.msra.mxu0 0.0
          %424 = vmatprep.subr.mxu0 0.0
          %425 = vmatpush2.msra.mxu0 0.0
          %426 = vmatprep.subr.mxu0 0.0
          %427 = vmatpush2.msra.mxu0 0.0
          %428 = vmatprep.subr.mxu0 0.0
          %429 = vmatpush2.msra.mxu0 0.0
          %430 = vmatprep.subr.mxu0 0.0
          %431 = vmatpush2.msra.mxu0 0.0
          %432 = vmatprep.subr.mxu0 0.0
          %433 = vmatpush2.msra.mxu0 0.0
          %434 = vmatprep.mubr.f32.mxu0 0.0
          %435 = vmatmul.mubr.f32.gmra.mxu0 %v365
          %v436 = vpop.f32.mrf.mxu0
          %v437 = vadd.f32 %v361, %v436
          %v438 = vpop.f32.mrf.mxu0
          %439 = vmatprep.mubr.f32.mxu0 0.0
          %440 = vmatmul.mubr.f32.gmra.mxu0 %v368
          %v441 = vpop.f32.mrf.mxu0
          %v442 = vadd.f32 %v361, %v441
          %v443 = vpop.f32.mrf.mxu0
          %444 = vdwg.mxu0
          %vm445 = vcmask 64512
          %446 = vst.msk [vmem:[#allocation2] sm:$0xff] %vm445, %v437
          %447 = vst.msk [vmem:[#allocation2 + $0x8] sm:$0xff] %vm445, %v442
          %s448 = scalar_lea.vmem %s3, 256
          %v449 = vld [vmem:[%s448] sm:$0xff]
          %v450 = vld [vmem:[%s448 + $0x8] sm:$0xff]
          %v451 = vld [vmem:[%s448 + $0x10] sm:$0xff]
          %v452 = vld [vmem:[%s448 + $0x18] sm:$0xff]
          %s453 = scalar_lea.vmem %s5, 8
          %v454 = vld [vmem:[%s453] sm:$0x1]
          %v456 = vlaneseq
          %v457 = vshrl.u32 %v456, 7
          %v458 = vsub.s32 0, %v457
          %v459 = vrot.slane %v454, %v458
          %v462 = vsel %vm363, %v348, 0
          %v465 = vsel %vm363, %v349, 0
          %467 = vmatprep.subr.mxu0 0.0
          %468 = vmatpush1.msra.mxu0 0.0
          %469 = vmatprep.subr.mxu0 0.0
          %470 = vmatpush1.msra.mxu0 0.0
          %471 = vmatprep.subr.mxu0 0.0
          %472 = vmatpush1.msra.mxu0 0.0
          %473 = vmatprep.subr.mxu0 0.0
          %474 = vmatpush1.msra.mxu0 0.0
          %475 = vmatprep.subr.mxu0 0.0
          %476 = vmatpush1.msra.mxu0 0.0
          %477 = vmatprep.subr.mxu0 0.0
          %478 = vmatpush1.msra.mxu0 0.0
          %479 = vmatprep.subr.mxu0 0.0
          %480 = vmatpush1.msra.mxu0 0.0
          %481 = vmatprep.subr.mxu0 0.0
          %482 = vmatpush1.msra.mxu0 0.0
          %483 = vmatprep.subr.mxu0 0.0
          %484 = vmatpush1.msra.mxu0 0.0
          %485 = vmatprep.subr.mxu0 0.0
          %486 = vmatpush1.msra.mxu0 0.0
          %487 = vmatprep.subr.mxu0 0.0
          %488 = vmatpush1.msra.mxu0 0.0
          %489 = vmatprep.subr.mxu0 0.0
          %490 = vmatpush1.msra.mxu0 0.0
          %491 = vmatprep.subr.mxu0 0.0
          %492 = vmatpush1.msra.mxu0 %v452
          %493 = vmatprep.subr.mxu0 0.0
          %494 = vmatpush1.msra.mxu0 %v451
          %495 = vmatprep.subr.mxu0 0.0
          %496 = vmatpush1.msra.mxu0 %v450
          %497 = vmatprep.subr.mxu0 0.0
          %498 = vmatpush1.msra.mxu0 %v449
          %499 = vmatprep.subr.mxu0 0.0
          %500 = vmatpush2.msra.mxu0 0.0
          %501 = vmatprep.subr.mxu0 0.0
          %502 = vmatpush2.msra.mxu0 0.0
          %503 = vmatprep.subr.mxu0 0.0
          %504 = vmatpush2.msra.mxu0 0.0
          %505 = vmatprep.subr.mxu0 0.0
          %506 = vmatpush2.msra.mxu0 0.0
          %507 = vmatprep.subr.mxu0 0.0
          %508 = vmatpush2.msra.mxu0 0.0
          %509 = vmatprep.subr.mxu0 0.0
          %510 = vmatpush2.msra.mxu0 0.0
          %511 = vmatprep.subr.mxu0 0.0
          %512 = vmatpush2.msra.mxu0 0.0
          %513 = vmatprep.subr.mxu0 0.0
          %514 = vmatpush2.msra.mxu0 0.0
          %515 = vmatprep.subr.mxu0 0.0
          %516 = vmatpush2.msra.mxu0 0.0
          %517 = vmatprep.subr.mxu0 0.0
          %518 = vmatpush2.msra.mxu0 0.0
          %519 = vmatprep.subr.mxu0 0.0
          %520 = vmatpush2.msra.mxu0 0.0
          %521 = vmatprep.subr.mxu0 0.0
          %522 = vmatpush2.msra.mxu0 0.0
          %523 = vmatprep.subr.mxu0 0.0
          %524 = vmatpush2.msra.mxu0 0.0
          %525 = vmatprep.subr.mxu0 0.0
          %526 = vmatpush2.msra.mxu0 0.0
          %527 = vmatprep.subr.mxu0 0.0
          %528 = vmatpush2.msra.mxu0 0.0
          %529 = vmatprep.subr.mxu0 0.0
          %530 = vmatpush2.msra.mxu0 0.0
          %531 = vmatprep.mubr.f32.mxu0 0.0
          %532 = vmatmul.mubr.f32.gmra.mxu0 %v462
          %v533 = vpop.f32.mrf.mxu0
          %v534 = vadd.f32 %v459, %v533
          %v535 = vpop.f32.mrf.mxu0
          %536 = vmatprep.mubr.f32.mxu0 0.0
          %537 = vmatmul.mubr.f32.gmra.mxu0 %v465
          %v538 = vpop.f32.mrf.mxu0
          %v539 = vadd.f32 %v459, %v538
          %v540 = vpop.f32.mrf.mxu0
          %541 = vdwg.mxu0
          %542 = vst.msk [vmem:[#allocation3] sm:$0xff] %vm445, %v534
          %543 = vst.msk [vmem:[#allocation3 + $0x8] sm:$0xff] %vm445, %v539
          %s544 = scalar_lea.vmem %s3, 160
          %v545 = vld [vmem:[%s544] sm:$0xff]
          %v546 = vld [vmem:[%s544 + $0x8] sm:$0xff]
          %v547 = vld [vmem:[%s544 + $0x10] sm:$0xff]
          %v548 = vld [vmem:[%s544 + $0x18] sm:$0xff]
          %s549 = scalar_lea.vmem %s5, 5
          %v550 = vld [vmem:[%s549] sm:$0x1]
          %v552 = vlaneseq
          %v553 = vshrl.u32 %v552, 7
          %v554 = vsub.s32 0, %v553
          %v555 = vrot.slane %v550, %v554
          %557 = vmatprep.subr.mxu0 0.0
          %558 = vmatpush1.msra.mxu0 0.0
          %559 = vmatprep.subr.mxu0 0.0
          %560 = vmatpush1.msra.mxu0 0.0
          %561 = vmatprep.subr.mxu0 0.0
          %562 = vmatpush1.msra.mxu0 0.0
          %563 = vmatprep.subr.mxu0 0.0
          %564 = vmatpush1.msra.mxu0 0.0
          %565 = vmatprep.subr.mxu0 0.0
          %566 = vmatpush1.msra.mxu0 0.0
          %567 = vmatprep.subr.mxu0 0.0
          %568 = vmatpush1.msra.mxu0 0.0
          %569 = vmatprep.subr.mxu0 0.0
          %570 = vmatpush1.msra.mxu0 0.0
          %571 = vmatprep.subr.mxu0 0.0
          %572 = vmatpush1.msra.mxu0 0.0
          %573 = vmatprep.subr.mxu0 0.0
          %574 = vmatpush1.msra.mxu0 0.0
          %575 = vmatprep.subr.mxu0 0.0
          %576 = vmatpush1.msra.mxu0 0.0
          %577 = vmatprep.subr.mxu0 0.0
          %578 = vmatpush1.msra.mxu0 0.0
          %579 = vmatprep.subr.mxu0 0.0
          %580 = vmatpush1.msra.mxu0 0.0
          %581 = vmatprep.subr.mxu0 0.0
          %582 = vmatpush1.msra.mxu0 %v548
          %583 = vmatprep.subr.mxu0 0.0
          %584 = vmatpush1.msra.mxu0 %v547
          %585 = vmatprep.subr.mxu0 0.0
          %586 = vmatpush1.msra.mxu0 %v546
          %587 = vmatprep.subr.mxu0 0.0
          %588 = vmatpush1.msra.mxu0 %v545
          %589 = vmatprep.subr.mxu0 0.0
          %590 = vmatpush2.msra.mxu0 0.0
          %591 = vmatprep.subr.mxu0 0.0
          %592 = vmatpush2.msra.mxu0 0.0
          %593 = vmatprep.subr.mxu0 0.0
          %594 = vmatpush2.msra.mxu0 0.0
          %595 = vmatprep.subr.mxu0 0.0
          %596 = vmatpush2.msra.mxu0 0.0
          %597 = vmatprep.subr.mxu0 0.0
          %598 = vmatpush2.msra.mxu0 0.0
          %599 = vmatprep.subr.mxu0 0.0
          %600 = vmatpush2.msra.mxu0 0.0
          %601 = vmatprep.subr.mxu0 0.0
          %602 = vmatpush2.msra.mxu0 0.0
          %603 = vmatprep.subr.mxu0 0.0
          %604 = vmatpush2.msra.mxu0 0.0
          %605 = vmatprep.subr.mxu0 0.0
          %606 = vmatpush2.msra.mxu0 0.0
          %607 = vmatprep.subr.mxu0 0.0
          %608 = vmatpush2.msra.mxu0 0.0
          %609 = vmatprep.subr.mxu0 0.0
          %610 = vmatpush2.msra.mxu0 0.0
          %611 = vmatprep.subr.mxu0 0.0
          %612 = vmatpush2.msra.mxu0 0.0
          %613 = vmatprep.subr.mxu0 0.0
          %614 = vmatpush2.msra.mxu0 0.0
          %615 = vmatprep.subr.mxu0 0.0
          %616 = vmatpush2.msra.mxu0 0.0
          %617 = vmatprep.subr.mxu0 0.0
          %618 = vmatpush2.msra.mxu0 0.0
          %619 = vmatprep.subr.mxu0 0.0
          %620 = vmatpush2.msra.mxu0 0.0
          %621 = vmatprep.mubr.f32.mxu0 0.0
          %622 = vmatmul.mubr.f32.gmra.mxu0 %v365
          %v623 = vpop.f32.mrf.mxu0
          %v624 = vadd.f32 %v555, %v623
          %v625 = vpop.f32.mrf.mxu0
          %626 = vmatprep.mubr.f32.mxu0 0.0
          %627 = vmatmul.mubr.f32.gmra.mxu0 %v368
          %v628 = vpop.f32.mrf.mxu0
          %v629 = vadd.f32 %v555, %v628
          %v630 = vpop.f32.mrf.mxu0
          %631 = vdwg.mxu0
          %s632 = scalar_lea.vmem [#allocation2], 16
          %633 = vst.msk [vmem:[%s632] sm:$0xff] %vm445, %v624
          %634 = vst.msk [vmem:[%s632 + $0x8] sm:$0xff] %vm445, %v629
          %s635 = scalar_lea.vmem %s3, 288
          %v636 = vld [vmem:[%s635] sm:$0xff]
          %v637 = vld [vmem:[%s635 + $0x8] sm:$0xff]
          %v638 = vld [vmem:[%s635 + $0x10] sm:$0xff]
          %v639 = vld [vmem:[%s635 + $0x18] sm:$0xff]
          %s640 = scalar_lea.vmem %s5, 9
          %v641 = vld [vmem:[%s640] sm:$0x1]
          %v643 = vlaneseq
          %v644 = vshrl.u32 %v643, 7
          %v645 = vsub.s32 0, %v644
          %v646 = vrot.slane %v641, %v645
          %648 = vmatprep.subr.mxu0 0.0
          %649 = vmatpush1.msra.mxu0 0.0
          %650 = vmatprep.subr.mxu0 0.0
          %651 = vmatpush1.msra.mxu0 0.0
          %652 = vmatprep.subr.mxu0 0.0
          %653 = vmatpush1.msra.mxu0 0.0
          %654 = vmatprep.subr.mxu0 0.0
          %655 = vmatpush1.msra.mxu0 0.0
          %656 = vmatprep.subr.mxu0 0.0
          %657 = vmatpush1.msra.mxu0 0.0
          %658 = vmatprep.subr.mxu0 0.0
          %659 = vmatpush1.msra.mxu0 0.0
          %660 = vmatprep.subr.mxu0 0.0
          %661 = vmatpush1.msra.mxu0 0.0
          %662 = vmatprep.subr.mxu0 0.0
          %663 = vmatpush1.msra.mxu0 0.0
          %664 = vmatprep.subr.mxu0 0.0
          %665 = vmatpush1.msra.mxu0 0.0
          %666 = vmatprep.subr.mxu0 0.0
          %667 = vmatpush1.msra.mxu0 0.0
          %668 = vmatprep.subr.mxu0 0.0
          %669 = vmatpush1.msra.mxu0 0.0
          %670 = vmatprep.subr.mxu0 0.0
          %671 = vmatpush1.msra.mxu0 0.0
          %672 = vmatprep.subr.mxu0 0.0
          %673 = vmatpush1.msra.mxu0 %v639
          %674 = vmatprep.subr.mxu0 0.0
          %675 = vmatpush1.msra.mxu0 %v638
          %676 = vmatprep.subr.mxu0 0.0
          %677 = vmatpush1.msra.mxu0 %v637
          %678 = vmatprep.subr.mxu0 0.0
          %679 = vmatpush1.msra.mxu0 %v636
          %680 = vmatprep.subr.mxu0 0.0
          %681 = vmatpush2.msra.mxu0 0.0
          %682 = vmatprep.subr.mxu0 0.0
          %683 = vmatpush2.msra.mxu0 0.0
          %684 = vmatprep.subr.mxu0 0.0
          %685 = vmatpush2.msra.mxu0 0.0
          %686 = vmatprep.subr.mxu0 0.0
          %687 = vmatpush2.msra.mxu0 0.0
          %688 = vmatprep.subr.mxu0 0.0
          %689 = vmatpush2.msra.mxu0 0.0
          %690 = vmatprep.subr.mxu0 0.0
          %691 = vmatpush2.msra.mxu0 0.0
          %692 = vmatprep.subr.mxu0 0.0
          %693 = vmatpush2.msra.mxu0 0.0
          %694 = vmatprep.subr.mxu0 0.0
          %695 = vmatpush2.msra.mxu0 0.0
          %696 = vmatprep.subr.mxu0 0.0
          %697 = vmatpush2.msra.mxu0 0.0
          %698 = vmatprep.subr.mxu0 0.0
          %699 = vmatpush2.msra.mxu0 0.0
          %700 = vmatprep.subr.mxu0 0.0
          %701 = vmatpush2.msra.mxu0 0.0
          %702 = vmatprep.subr.mxu0 0.0
          %703 = vmatpush2.msra.mxu0 0.0
          %704 = vmatprep.subr.mxu0 0.0
          %705 = vmatpush2.msra.mxu0 0.0
          %706 = vmatprep.subr.mxu0 0.0
          %707 = vmatpush2.msra.mxu0 0.0
          %708 = vmatprep.subr.mxu0 0.0
          %709 = vmatpush2.msra.mxu0 0.0
          %710 = vmatprep.subr.mxu0 0.0
          %711 = vmatpush2.msra.mxu0 0.0
          %712 = vmatprep.mubr.f32.mxu0 0.0
          %713 = vmatmul.mubr.f32.gmra.mxu0 %v462
          %v714 = vpop.f32.mrf.mxu0
          %v715 = vadd.f32 %v646, %v714
          %v716 = vpop.f32.mrf.mxu0
          %717 = vmatprep.mubr.f32.mxu0 0.0
          %718 = vmatmul.mubr.f32.gmra.mxu0 %v465
          %v719 = vpop.f32.mrf.mxu0
          %v720 = vadd.f32 %v646, %v719
          %v721 = vpop.f32.mrf.mxu0
          %722 = vdwg.mxu0
          %s723 = scalar_lea.vmem [#allocation3], 16
          %724 = vst.msk [vmem:[%s723] sm:$0xff] %vm445, %v715
          %725 = vst.msk [vmem:[%s723 + $0x8] sm:$0xff] %vm445, %v720
          %s726 = scalar_lea.vmem %s3, 192
          %v727 = vld [vmem:[%s726] sm:$0xff]
          %v728 = vld [vmem:[%s726 + $0x8] sm:$0xff]
          %v729 = vld [vmem:[%s726 + $0x10] sm:$0xff]
          %v730 = vld [vmem:[%s726 + $0x18] sm:$0xff]
          %s731 = scalar_lea.vmem %s5, 6
          %v732 = vld [vmem:[%s731] sm:$0x1]
          %v734 = vlaneseq
          %v735 = vshrl.u32 %v734, 7
          %v736 = vsub.s32 0, %v735
          %v737 = vrot.slane %v732, %v736
          %739 = vmatprep.subr.mxu0 0.0
          %740 = vmatpush1.msra.mxu0 0.0
          %741 = vmatprep.subr.mxu0 0.0
          %742 = vmatpush1.msra.mxu0 0.0
          %743 = vmatprep.subr.mxu0 0.0
          %744 = vmatpush1.msra.mxu0 0.0
          %745 = vmatprep.subr.mxu0 0.0
          %746 = vmatpush1.msra.mxu0 0.0
          %747 = vmatprep.subr.mxu0 0.0
          %748 = vmatpush1.msra.mxu0 0.0
          %749 = vmatprep.subr.mxu0 0.0
          %750 = vmatpush1.msra.mxu0 0.0
          %751 = vmatprep.subr.mxu0 0.0
          %752 = vmatpush1.msra.mxu0 0.0
          %753 = vmatprep.subr.mxu0 0.0
          %754 = vmatpush1.msra.mxu0 0.0
          %755 = vmatprep.subr.mxu0 0.0
          %756 = vmatpush1.msra.mxu0 0.0
          %757 = vmatprep.subr.mxu0 0.0
          %758 = vmatpush1.msra.mxu0 0.0
          %759 = vmatprep.subr.mxu0 0.0
          %760 = vmatpush1.msra.mxu0 0.0
          %761 = vmatprep.subr.mxu0 0.0
          %762 = vmatpush1.msra.mxu0 0.0
          %763 = vmatprep.subr.mxu0 0.0
          %764 = vmatpush1.msra.mxu0 %v730
          %765 = vmatprep.subr.mxu0 0.0
          %766 = vmatpush1.msra.mxu0 %v729
          %767 = vmatprep.subr.mxu0 0.0
          %768 = vmatpush1.msra.mxu0 %v728
          %769 = vmatprep.subr.mxu0 0.0
          %770 = vmatpush1.msra.mxu0 %v727
          %771 = vmatprep.subr.mxu0 0.0
          %772 = vmatpush2.msra.mxu0 0.0
          %773 = vmatprep.subr.mxu0 0.0
          %774 = vmatpush2.msra.mxu0 0.0
          %775 = vmatprep.subr.mxu0 0.0
          %776 = vmatpush2.msra.mxu0 0.0
          %777 = vmatprep.subr.mxu0 0.0
          %778 = vmatpush2.msra.mxu0 0.0
          %779 = vmatprep.subr.mxu0 0.0
          %780 = vmatpush2.msra.mxu0 0.0
          %781 = vmatprep.subr.mxu0 0.0
          %782 = vmatpush2.msra.mxu0 0.0
          %783 = vmatprep.subr.mxu0 0.0
          %784 = vmatpush2.msra.mxu0 0.0
          %785 = vmatprep.subr.mxu0 0.0
          %786 = vmatpush2.msra.mxu0 0.0
          %787 = vmatprep.subr.mxu0 0.0
          %788 = vmatpush2.msra.mxu0 0.0
          %789 = vmatprep.subr.mxu0 0.0
          %790 = vmatpush2.msra.mxu0 0.0
          %791 = vmatprep.subr.mxu0 0.0
          %792 = vmatpush2.msra.mxu0 0.0
          %793 = vmatprep.subr.mxu0 0.0
          %794 = vmatpush2.msra.mxu0 0.0
          %795 = vmatprep.subr.mxu0 0.0
          %796 = vmatpush2.msra.mxu0 0.0
          %797 = vmatprep.subr.mxu0 0.0
          %798 = vmatpush2.msra.mxu0 0.0
          %799 = vmatprep.subr.mxu0 0.0
          %800 = vmatpush2.msra.mxu0 0.0
          %801 = vmatprep.subr.mxu0 0.0
          %802 = vmatpush2.msra.mxu0 0.0
          %803 = vmatprep.mubr.f32.mxu0 0.0
          %804 = vmatmul.mubr.f32.gmra.mxu0 %v365
          %v805 = vpop.f32.mrf.mxu0
          %v806 = vadd.f32 %v737, %v805
          %v807 = vpop.f32.mrf.mxu0
          %808 = vmatprep.mubr.f32.mxu0 0.0
          %809 = vmatmul.mubr.f32.gmra.mxu0 %v368
          %v810 = vpop.f32.mrf.mxu0
          %v811 = vadd.f32 %v737, %v810
          %v812 = vpop.f32.mrf.mxu0
          %813 = vdwg.mxu0
          %s814 = scalar_lea.vmem [#allocation2], 32
          %815 = vst.msk [vmem:[%s814] sm:$0xff] %vm445, %v806
          %816 = vst.msk [vmem:[%s814 + $0x8] sm:$0xff] %vm445, %v811
          %s817 = scalar_lea.vmem %s3, 320
          %v818 = vld [vmem:[%s817] sm:$0xff]
          %v819 = vld [vmem:[%s817 + $0x8] sm:$0xff]
          %v820 = vld [vmem:[%s817 + $0x10] sm:$0xff]
          %v821 = vld [vmem:[%s817 + $0x18] sm:$0xff]
          %s822 = scalar_lea.vmem %s5, 10
          %v823 = vld [vmem:[%s822] sm:$0x1]
          %v825 = vlaneseq
          %v826 = vshrl.u32 %v825, 7
          %v827 = vsub.s32 0, %v826
          %v828 = vrot.slane %v823, %v827
          %830 = vmatprep.subr.mxu0 0.0
          %831 = vmatpush1.msra.mxu0 0.0
          %832 = vmatprep.subr.mxu0 0.0
          %833 = vmatpush1.msra.mxu0 0.0
          %834 = vmatprep.subr.mxu0 0.0
          %835 = vmatpush1.msra.mxu0 0.0
          %836 = vmatprep.subr.mxu0 0.0
          %837 = vmatpush1.msra.mxu0 0.0
          %838 = vmatprep.subr.mxu0 0.0
          %839 = vmatpush1.msra.mxu0 0.0
          %840 = vmatprep.subr.mxu0 0.0
          %841 = vmatpush1.msra.mxu0 0.0
          %842 = vmatprep.subr.mxu0 0.0
          %843 = vmatpush1.msra.mxu0 0.0
          %844 = vmatprep.subr.mxu0 0.0
          %845 = vmatpush1.msra.mxu0 0.0
          %846 = vmatprep.subr.mxu0 0.0
          %847 = vmatpush1.msra.mxu0 0.0
          %848 = vmatprep.subr.mxu0 0.0
          %849 = vmatpush1.msra.mxu0 0.0
          %850 = vmatprep.subr.mxu0 0.0
          %851 = vmatpush1.msra.mxu0 0.0
          %852 = vmatprep.subr.mxu0 0.0
          %853 = vmatpush1.msra.mxu0 0.0
          %854 = vmatprep.subr.mxu0 0.0
          %855 = vmatpush1.msra.mxu0 %v821
          %856 = vmatprep.subr.mxu0 0.0
          %857 = vmatpush1.msra.mxu0 %v820
          %858 = vmatprep.subr.mxu0 0.0
          %859 = vmatpush1.msra.mxu0 %v819
          %860 = vmatprep.subr.mxu0 0.0
          %861 = vmatpush1.msra.mxu0 %v818
          %862 = vmatprep.subr.mxu0 0.0
          %863 = vmatpush2.msra.mxu0 0.0
          %864 = vmatprep.subr.mxu0 0.0
          %865 = vmatpush2.msra.mxu0 0.0
          %866 = vmatprep.subr.mxu0 0.0
          %867 = vmatpush2.msra.mxu0 0.0
          %868 = vmatprep.subr.mxu0 0.0
          %869 = vmatpush2.msra.mxu0 0.0
          %870 = vmatprep.subr.mxu0 0.0
          %871 = vmatpush2.msra.mxu0 0.0
          %872 = vmatprep.subr.mxu0 0.0
          %873 = vmatpush2.msra.mxu0 0.0
          %874 = vmatprep.subr.mxu0 0.0
          %875 = vmatpush2.msra.mxu0 0.0
          %876 = vmatprep.subr.mxu0 0.0
          %877 = vmatpush2.msra.mxu0 0.0
          %878 = vmatprep.subr.mxu0 0.0
          %879 = vmatpush2.msra.mxu0 0.0
          %880 = vmatprep.subr.mxu0 0.0
          %881 = vmatpush2.msra.mxu0 0.0
          %882 = vmatprep.subr.mxu0 0.0
          %883 = vmatpush2.msra.mxu0 0.0
          %884 = vmatprep.subr.mxu0 0.0
          %885 = vmatpush2.msra.mxu0 0.0
          %886 = vmatprep.subr.mxu0 0.0
          %887 = vmatpush2.msra.mxu0 0.0
          %888 = vmatprep.subr.mxu0 0.0
          %889 = vmatpush2.msra.mxu0 0.0
          %890 = vmatprep.subr.mxu0 0.0
          %891 = vmatpush2.msra.mxu0 0.0
          %892 = vmatprep.subr.mxu0 0.0
          %893 = vmatpush2.msra.mxu0 0.0
          %894 = vmatprep.mubr.f32.mxu0 0.0
          %895 = vmatmul.mubr.f32.gmra.mxu0 %v462
          %v896 = vpop.f32.mrf.mxu0
          %v897 = vadd.f32 %v828, %v896
          %v898 = vpop.f32.mrf.mxu0
          %899 = vmatprep.mubr.f32.mxu0 0.0
          %900 = vmatmul.mubr.f32.gmra.mxu0 %v465
          %v901 = vpop.f32.mrf.mxu0
          %v902 = vadd.f32 %v828, %v901
          %v903 = vpop.f32.mrf.mxu0
          %904 = vdwg.mxu0
          %s905 = scalar_lea.vmem [#allocation3], 32
          %906 = vst.msk [vmem:[%s905] sm:$0xff] %vm445, %v897
          %907 = vst.msk [vmem:[%s905 + $0x8] sm:$0xff] %vm445, %v902
          %s908 = scalar_lea.vmem %s3, 224
          %v909 = vld [vmem:[%s908] sm:$0xff]
          %v910 = vld [vmem:[%s908 + $0x8] sm:$0xff]
          %v911 = vld [vmem:[%s908 + $0x10] sm:$0xff]
          %v912 = vld [vmem:[%s908 + $0x18] sm:$0xff]
          %s913 = scalar_lea.vmem %s5, 7
          %v914 = vld [vmem:[%s913] sm:$0x1]
          %v916 = vlaneseq
          %v917 = vshrl.u32 %v916, 7
          %v918 = vsub.s32 0, %v917
          %v919 = vrot.slane %v914, %v918
          %921 = vmatprep.subr.mxu0 0.0
          %922 = vmatpush1.msra.mxu0 0.0
          %923 = vmatprep.subr.mxu0 0.0
          %924 = vmatpush1.msra.mxu0 0.0
          %925 = vmatprep.subr.mxu0 0.0
          %926 = vmatpush1.msra.mxu0 0.0
          %927 = vmatprep.subr.mxu0 0.0
          %928 = vmatpush1.msra.mxu0 0.0
          %929 = vmatprep.subr.mxu0 0.0
          %930 = vmatpush1.msra.mxu0 0.0
          %931 = vmatprep.subr.mxu0 0.0
          %932 = vmatpush1.msra.mxu0 0.0
          %933 = vmatprep.subr.mxu0 0.0
          %934 = vmatpush1.msra.mxu0 0.0
          %935 = vmatprep.subr.mxu0 0.0
          %936 = vmatpush1.msra.mxu0 0.0
          %937 = vmatprep.subr.mxu0 0.0
          %938 = vmatpush1.msra.mxu0 0.0
          %939 = vmatprep.subr.mxu0 0.0
          %940 = vmatpush1.msra.mxu0 0.0
          %941 = vmatprep.subr.mxu0 0.0
          %942 = vmatpush1.msra.mxu0 0.0
          %943 = vmatprep.subr.mxu0 0.0
          %944 = vmatpush1.msra.mxu0 0.0
          %945 = vmatprep.subr.mxu0 0.0
          %946 = vmatpush1.msra.mxu0 %v912
          %947 = vmatprep.subr.mxu0 0.0
          %948 = vmatpush1.msra.mxu0 %v911
          %949 = vmatprep.subr.mxu0 0.0
          %950 = vmatpush1.msra.mxu0 %v910
          %951 = vmatprep.subr.mxu0 0.0
          %952 = vmatpush1.msra.mxu0 %v909
          %953 = vmatprep.subr.mxu0 0.0
          %954 = vmatpush2.msra.mxu0 0.0
          %955 = vmatprep.subr.mxu0 0.0
          %956 = vmatpush2.msra.mxu0 0.0
          %957 = vmatprep.subr.mxu0 0.0
          %958 = vmatpush2.msra.mxu0 0.0
          %959 = vmatprep.subr.mxu0 0.0
          %960 = vmatpush2.msra.mxu0 0.0
          %961 = vmatprep.subr.mxu0 0.0
          %962 = vmatpush2.msra.mxu0 0.0
          %963 = vmatprep.subr.mxu0 0.0
          %964 = vmatpush2.msra.mxu0 0.0
          %965 = vmatprep.subr.mxu0 0.0
          %966 = vmatpush2.msra.mxu0 0.0
          %967 = vmatprep.subr.mxu0 0.0
          %968 = vmatpush2.msra.mxu0 0.0
          %969 = vmatprep.subr.mxu0 0.0
          %970 = vmatpush2.msra.mxu0 0.0
          %971 = vmatprep.subr.mxu0 0.0
          %972 = vmatpush2.msra.mxu0 0.0
          %973 = vmatprep.subr.mxu0 0.0
          %974 = vmatpush2.msra.mxu0 0.0
          %975 = vmatprep.subr.mxu0 0.0
          %976 = vmatpush2.msra.mxu0 0.0
          %977 = vmatprep.subr.mxu0 0.0
          %978 = vmatpush2.msra.mxu0 0.0
          %979 = vmatprep.subr.mxu0 0.0
          %980 = vmatpush2.msra.mxu0 0.0
          %981 = vmatprep.subr.mxu0 0.0
          %982 = vmatpush2.msra.mxu0 0.0
          %983 = vmatprep.subr.mxu0 0.0
          %984 = vmatpush2.msra.mxu0 0.0
          %985 = vmatprep.mubr.f32.mxu0 0.0
          %986 = vmatmul.mubr.f32.gmra.mxu0 %v365
          %v987 = vpop.f32.mrf.mxu0
          %v988 = vadd.f32 %v919, %v987
          %v989 = vpop.f32.mrf.mxu0
          %990 = vmatprep.mubr.f32.mxu0 0.0
          %991 = vmatmul.mubr.f32.gmra.mxu0 %v368
          %v992 = vpop.f32.mrf.mxu0
          %v993 = vadd.f32 %v919, %v992
          %v994 = vpop.f32.mrf.mxu0
          %995 = vdwg.mxu0
          %s996 = scalar_lea.vmem [#allocation2], 48
          %997 = vst.msk [vmem:[%s996] sm:$0xff] %vm445, %v988
          %998 = vst.msk [vmem:[%s996 + $0x8] sm:$0xff] %vm445, %v993
          %s999 = scalar_lea.vmem %s3, 352
          %v1000 = vld [vmem:[%s999] sm:$0xff]
          %v1001 = vld [vmem:[%s999 + $0x8] sm:$0xff]
          %v1002 = vld [vmem:[%s999 + $0x10] sm:$0xff]
          %v1003 = vld [vmem:[%s999 + $0x18] sm:$0xff]
          %s1004 = scalar_lea.vmem %s5, 11
          %v1005 = vld [vmem:[%s1004] sm:$0x1]
          %v1007 = vlaneseq
          %v1008 = vshrl.u32 %v1007, 7
          %v1009 = vsub.s32 0, %v1008
          %v1010 = vrot.slane %v1005, %v1009
          %1012 = vmatprep.subr.mxu0 0.0
          %1013 = vmatpush1.msra.mxu0 0.0
          %1014 = vmatprep.subr.mxu0 0.0
          %1015 = vmatpush1.msra.mxu0 0.0
          %1016 = vmatprep.subr.mxu0 0.0
          %1017 = vmatpush1.msra.mxu0 0.0
          %1018 = vmatprep.subr.mxu0 0.0
          %1019 = vmatpush1.msra.mxu0 0.0
          %1020 = vmatprep.subr.mxu0 0.0
          %1021 = vmatpush1.msra.mxu0 0.0
          %1022 = vmatprep.subr.mxu0 0.0
          %1023 = vmatpush1.msra.mxu0 0.0
          %1024 = vmatprep.subr.mxu0 0.0
          %1025 = vmatpush1.msra.mxu0 0.0
          %1026 = vmatprep.subr.mxu0 0.0
          %1027 = vmatpush1.msra.mxu0 0.0
          %1028 = vmatprep.subr.mxu0 0.0
          %1029 = vmatpush1.msra.mxu0 0.0
          %1030 = vmatprep.subr.mxu0 0.0
          %1031 = vmatpush1.msra.mxu0 0.0
          %1032 = vmatprep.subr.mxu0 0.0
          %1033 = vmatpush1.msra.mxu0 0.0
          %1034 = vmatprep.subr.mxu0 0.0
          %1035 = vmatpush1.msra.mxu0 0.0
          %1036 = vmatprep.subr.mxu0 0.0
          %1037 = vmatpush1.msra.mxu0 %v1003
          %1038 = vmatprep.subr.mxu0 0.0
          %1039 = vmatpush1.msra.mxu0 %v1002
          %1040 = vmatprep.subr.mxu0 0.0
          %1041 = vmatpush1.msra.mxu0 %v1001
          %1042 = vmatprep.subr.mxu0 0.0
          %1043 = vmatpush1.msra.mxu0 %v1000
          %1044 = vmatprep.subr.mxu0 0.0
          %1045 = vmatpush2.msra.mxu0 0.0
          %1046 = vmatprep.subr.mxu0 0.0
          %1047 = vmatpush2.msra.mxu0 0.0
          %1048 = vmatprep.subr.mxu0 0.0
          %1049 = vmatpush2.msra.mxu0 0.0
          %1050 = vmatprep.subr.mxu0 0.0
          %1051 = vmatpush2.msra.mxu0 0.0
          %1052 = vmatprep.subr.mxu0 0.0
          %1053 = vmatpush2.msra.mxu0 0.0
          %1054 = vmatprep.subr.mxu0 0.0
          %1055 = vmatpush2.msra.mxu0 0.0
          %1056 = vmatprep.subr.mxu0 0.0
          %1057 = vmatpush2.msra.mxu0 0.0
          %1058 = vmatprep.subr.mxu0 0.0
          %1059 = vmatpush2.msra.mxu0 0.0
          %1060 = vmatprep.subr.mxu0 0.0
          %1061 = vmatpush2.msra.mxu0 0.0
          %1062 = vmatprep.subr.mxu0 0.0
          %1063 = vmatpush2.msra.mxu0 0.0
          %1064 = vmatprep.subr.mxu0 0.0
          %1065 = vmatpush2.msra.mxu0 0.0
          %1066 = vmatprep.subr.mxu0 0.0
          %1067 = vmatpush2.msra.mxu0 0.0
          %1068 = vmatprep.subr.mxu0 0.0
          %1069 = vmatpush2.msra.mxu0 0.0
          %1070 = vmatprep.subr.mxu0 0.0
          %1071 = vmatpush2.msra.mxu0 0.0
          %1072 = vmatprep.subr.mxu0 0.0
          %1073 = vmatpush2.msra.mxu0 0.0
          %1074 = vmatprep.subr.mxu0 0.0
          %1075 = vmatpush2.msra.mxu0 0.0
          %1076 = vmatprep.mubr.f32.mxu0 0.0
          %1077 = vmatmul.mubr.f32.gmra.mxu0 %v462
          %v1078 = vpop.f32.mrf.mxu0
          %v1079 = vadd.f32 %v1010, %v1078
          %v1080 = vpop.f32.mrf.mxu0
          %1081 = vmatprep.mubr.f32.mxu0 0.0
          %1082 = vmatmul.mubr.f32.gmra.mxu0 %v465
          %v1083 = vpop.f32.mrf.mxu0
          %v1084 = vadd.f32 %v1010, %v1083
          %v1085 = vpop.f32.mrf.mxu0
          %1086 = vdwg.mxu0
          %s1087 = scalar_lea.vmem [#allocation3], 48
          %1088 = vst.msk [vmem:[%s1087] sm:$0xff] %vm445, %v1079
          %1089 = vst.msk [vmem:[%s1087 + $0x8] sm:$0xff] %vm445, %v1084
        $region52: #{tpu_custom_call.1} parent=47 // pred_fallthru
          _
        %v1090 = vld [vmem:[%s331] sm:$0xff]
        %v1091 = vld [vmem:[%s3] sm:$0xff]
        %v1092 = vld [vmem:[%s3 + $0x8] sm:$0xff]
        %v1093 = vld [vmem:[%s3 + $0x10] sm:$0xff]
        %v1094 = vld [vmem:[%s3 + $0x18] sm:$0xff]
        %v1095 = vld [vmem:[%s5] sm:$0x1]
        %v1097 = vlaneseq
        %v1098 = vshrl.u32 %v1097, 7
        %v1099 = vsub.s32 0, %v1098
        %v1100 = vrot.slane %v1095, %v1099
        %vm1102 = vcmask 261120
        %v1104 = vsel %vm1102, %v1090, 0
        %1106 = vmatprep.subr.mxu0 0.0
        %1107 = vmatpush1.msra.mxu0 0.0
        %1108 = vmatprep.subr.mxu0 0.0
        %1109 = vmatpush1.msra.mxu0 0.0
        %1110 = vmatprep.subr.mxu0 0.0
        %1111 = vmatpush1.msra.mxu0 0.0
        %1112 = vmatprep.subr.mxu0 0.0
        %1113 = vmatpush1.msra.mxu0 0.0
        %1114 = vmatprep.subr.mxu0 0.0
        %1115 = vmatpush1.msra.mxu0 0.0
        %1116 = vmatprep.subr.mxu0 0.0
        %1117 = vmatpush1.msra.mxu0 0.0
        %1118 = vmatprep.subr.mxu0 0.0
        %1119 = vmatpush1.msra.mxu0 0.0
        %1120 = vmatprep.subr.mxu0 0.0
        %1121 = vmatpush1.msra.mxu0 0.0
        %1122 = vmatprep.subr.mxu0 0.0
        %1123 = vmatpush1.msra.mxu0 0.0
        %1124 = vmatprep.subr.mxu0 0.0
        %1125 = vmatpush1.msra.mxu0 0.0
        %1126 = vmatprep.subr.mxu0 0.0
        %1127 = vmatpush1.msra.mxu0 0.0
        %1128 = vmatprep.subr.mxu0 0.0
        %1129 = vmatpush1.msra.mxu0 0.0
        %1130 = vmatprep.subr.mxu0 0.0
        %1131 = vmatpush1.msra.mxu0 %v1094
        %1132 = vmatprep.subr.mxu0 0.0
        %1133 = vmatpush1.msra.mxu0 %v1093
        %1134 = vmatprep.subr.mxu0 0.0
        %1135 = vmatpush1.msra.mxu0 %v1092
        %1136 = vmatprep.subr.mxu0 0.0
        %1137 = vmatpush1.msra.mxu0 %v1091
        %1138 = vmatprep.subr.mxu0 0.0
        %1139 = vmatpush2.msra.mxu0 0.0
        %1140 = vmatprep.subr.mxu0 0.0
        %1141 = vmatpush2.msra.mxu0 0.0
        %1142 = vmatprep.subr.mxu0 0.0
        %1143 = vmatpush2.msra.mxu0 0.0
        %1144 = vmatprep.subr.mxu0 0.0
        %1145 = vmatpush2.msra.mxu0 0.0
        %1146 = vmatprep.subr.mxu0 0.0
        %1147 = vmatpush2.msra.mxu0 0.0
        %1148 = vmatprep.subr.mxu0 0.0
        %1149 = vmatpush2.msra.mxu0 0.0
        %1150 = vmatprep.subr.mxu0 0.0
        %1151 = vmatpush2.msra.mxu0 0.0
        %1152 = vmatprep.subr.mxu0 0.0
        %1153 = vmatpush2.msra.mxu0 0.0
        %1154 = vmatprep.subr.mxu0 0.0
        %1155 = vmatpush2.msra.mxu0 0.0
        %1156 = vmatprep.subr.mxu0 0.0
        %1157 = vmatpush2.msra.mxu0 0.0
        %1158 = vmatprep.subr.mxu0 0.0
        %1159 = vmatpush2.msra.mxu0 0.0
        %1160 = vmatprep.subr.mxu0 0.0
        %1161 = vmatpush2.msra.mxu0 0.0
        %1162 = vmatprep.subr.mxu0 0.0
        %1163 = vmatpush2.msra.mxu0 0.0
        %1164 = vmatprep.subr.mxu0 0.0
        %1165 = vmatpush2.msra.mxu0 0.0
        %1166 = vmatprep.subr.mxu0 0.0
        %1167 = vmatpush2.msra.mxu0 0.0
        %1168 = vmatprep.subr.mxu0 0.0
        %1169 = vmatpush2.msra.mxu0 0.0
        %1170 = vmatprep.mubr.f32.mxu0 0.0
        %1171 = vmatmul.mubr.f32.gmra.mxu0 %v1104
        %v1172 = vpop.f32.mrf.mxu0
        %v1173 = vadd.f32 %v1100, %v1172
        %v1174 = vpop.f32.mrf.mxu0
        %1175 = vdwg.mxu0
        %s1176 = scalar_lea.vmem %s3, 32
        %v1177 = vld [vmem:[%s1176] sm:$0xff]
        %v1178 = vld [vmem:[%s1176 + $0x8] sm:$0xff]
        %v1179 = vld [vmem:[%s1176 + $0x10] sm:$0xff]
        %v1180 = vld [vmem:[%s1176 + $0x18] sm:$0xff]
        %s1181 = scalar_lea.vmem %s5, 1
        %v1182 = vld [vmem:[%s1181] sm:$0x1]
        %v1184 = vlaneseq
        %v1185 = vshrl.u32 %v1184, 7
        %v1186 = vsub.s32 0, %v1185
        %v1187 = vrot.slane %v1182, %v1186
        %1189 = vmatprep.subr.mxu0 0.0
        %1190 = vmatpush1.msra.mxu0 0.0
        %1191 = vmatprep.subr.mxu0 0.0
        %1192 = vmatpush1.msra.mxu0 0.0
        %1193 = vmatprep.subr.mxu0 0.0
        %1194 = vmatpush1.msra.mxu0 0.0
        %1195 = vmatprep.subr.mxu0 0.0
        %1196 = vmatpush1.msra.mxu0 0.0
        %1197 = vmatprep.subr.mxu0 0.0
        %1198 = vmatpush1.msra.mxu0 0.0
        %1199 = vmatprep.subr.mxu0 0.0
        %1200 = vmatpush1.msra.mxu0 0.0
        %1201 = vmatprep.subr.mxu0 0.0
        %1202 = vmatpush1.msra.mxu0 0.0
        %1203 = vmatprep.subr.mxu0 0.0
        %1204 = vmatpush1.msra.mxu0 0.0
        %1205 = vmatprep.subr.mxu0 0.0
        %1206 = vmatpush1.msra.mxu0 0.0
        %1207 = vmatprep.subr.mxu0 0.0
        %1208 = vmatpush1.msra.mxu0 0.0
        %1209 = vmatprep.subr.mxu0 0.0
        %1210 = vmatpush1.msra.mxu0 0.0
        %1211 = vmatprep.subr.mxu0 0.0
        %1212 = vmatpush1.msra.mxu0 0.0
        %1213 = vmatprep.subr.mxu0 0.0
        %1214 = vmatpush1.msra.mxu0 %v1180
        %1215 = vmatprep.subr.mxu0 0.0
        %1216 = vmatpush1.msra.mxu0 %v1179
        %1217 = vmatprep.subr.mxu0 0.0
        %1218 = vmatpush1.msra.mxu0 %v1178
        %1219 = vmatprep.subr.mxu0 0.0
        %1220 = vmatpush1.msra.mxu0 %v1177
        %1221 = vmatprep.subr.mxu0 0.0
        %1222 = vmatpush2.msra.mxu0 0.0
        %1223 = vmatprep.subr.mxu0 0.0
        %1224 = vmatpush2.msra.mxu0 0.0
        %1225 = vmatprep.subr.mxu0 0.0
        %1226 = vmatpush2.msra.mxu0 0.0
        %1227 = vmatprep.subr.mxu0 0.0
        %1228 = vmatpush2.msra.mxu0 0.0
        %1229 = vmatprep.subr.mxu0 0.0
        %1230 = vmatpush2.msra.mxu0 0.0
        %1231 = vmatprep.subr.mxu0 0.0
        %1232 = vmatpush2.msra.mxu0 0.0
        %1233 = vmatprep.subr.mxu0 0.0
        %1234 = vmatpush2.msra.mxu0 0.0
        %1235 = vmatprep.subr.mxu0 0.0
        %1236 = vmatpush2.msra.mxu0 0.0
        %1237 = vmatprep.subr.mxu0 0.0
        %1238 = vmatpush2.msra.mxu0 0.0
        %1239 = vmatprep.subr.mxu0 0.0
        %1240 = vmatpush2.msra.mxu0 0.0
        %1241 = vmatprep.subr.mxu0 0.0
        %1242 = vmatpush2.msra.mxu0 0.0
        %1243 = vmatprep.subr.mxu0 0.0
        %1244 = vmatpush2.msra.mxu0 0.0
        %1245 = vmatprep.subr.mxu0 0.0
        %1246 = vmatpush2.msra.mxu0 0.0
        %1247 = vmatprep.subr.mxu0 0.0
        %1248 = vmatpush2.msra.mxu0 0.0
        %1249 = vmatprep.subr.mxu0 0.0
        %1250 = vmatpush2.msra.mxu0 0.0
        %1251 = vmatprep.subr.mxu0 0.0
        %1252 = vmatpush2.msra.mxu0 0.0
        %1253 = vmatprep.mubr.f32.mxu0 0.0
        %1254 = vmatmul.mubr.f32.gmra.mxu0 %v1104
        %v1255 = vpop.f32.mrf.mxu0
        %v1256 = vadd.f32 %v1187, %v1255
        %v1257 = vpop.f32.mrf.mxu0
        %1258 = vdwg.mxu0
        %s1259 = scalar_lea.vmem %s3, 64
        %v1260 = vld [vmem:[%s1259] sm:$0xff]
        %v1261 = vld [vmem:[%s1259 + $0x8] sm:$0xff]
        %v1262 = vld [vmem:[%s1259 + $0x10] sm:$0xff]
        %v1263 = vld [vmem:[%s1259 + $0x18] sm:$0xff]
        %s1264 = scalar_lea.vmem %s5, 2
        %v1265 = vld [vmem:[%s1264] sm:$0x1]
        %v1267 = vlaneseq
        %v1268 = vshrl.u32 %v1267, 7
        %v1269 = vsub.s32 0, %v1268
        %v1270 = vrot.slane %v1265, %v1269
        %1272 = vmatprep.subr.mxu0 0.0
        %1273 = vmatpush1.msra.mxu0 0.0
        %1274 = vmatprep.subr.mxu0 0.0
        %1275 = vmatpush1.msra.mxu0 0.0
        %1276 = vmatprep.subr.mxu0 0.0
        %1277 = vmatpush1.msra.mxu0 0.0
        %1278 = vmatprep.subr.mxu0 0.0
        %1279 = vmatpush1.msra.mxu0 0.0
        %1280 = vmatprep.subr.mxu0 0.0
        %1281 = vmatpush1.msra.mxu0 0.0
        %1282 = vmatprep.subr.mxu0 0.0
        %1283 = vmatpush1.msra.mxu0 0.0
        %1284 = vmatprep.subr.mxu0 0.0
        %1285 = vmatpush1.msra.mxu0 0.0
        %1286 = vmatprep.subr.mxu0 0.0
        %1287 = vmatpush1.msra.mxu0 0.0
        %1288 = vmatprep.subr.mxu0 0.0
        %1289 = vmatpush1.msra.mxu0 0.0
        %1290 = vmatprep.subr.mxu0 0.0
        %1291 = vmatpush1.msra.mxu0 0.0
        %1292 = vmatprep.subr.mxu0 0.0
        %1293 = vmatpush1.msra.mxu0 0.0
        %1294 = vmatprep.subr.mxu0 0.0
        %1295 = vmatpush1.msra.mxu0 0.0
        %1296 = vmatprep.subr.mxu0 0.0
        %1297 = vmatpush1.msra.mxu0 %v1263
        %1298 = vmatprep.subr.mxu0 0.0
        %1299 = vmatpush1.msra.mxu0 %v1262
        %1300 = vmatprep.subr.mxu0 0.0
        %1301 = vmatpush1.msra.mxu0 %v1261
        %1302 = vmatprep.subr.mxu0 0.0
        %1303 = vmatpush1.msra.mxu0 %v1260
        %1304 = vmatprep.subr.mxu0 0.0
        %1305 = vmatpush2.msra.mxu0 0.0
        %1306 = vmatprep.subr.mxu0 0.0
        %1307 = vmatpush2.msra.mxu0 0.0
        %1308 = vmatprep.subr.mxu0 0.0
        %1309 = vmatpush2.msra.mxu0 0.0
        %1310 = vmatprep.subr.mxu0 0.0
        %1311 = vmatpush2.msra.mxu0 0.0
        %1312 = vmatprep.subr.mxu0 0.0
        %1313 = vmatpush2.msra.mxu0 0.0
        %1314 = vmatprep.subr.mxu0 0.0
        %1315 = vmatpush2.msra.mxu0 0.0
        %1316 = vmatprep.subr.mxu0 0.0
        %1317 = vmatpush2.msra.mxu0 0.0
        %1318 = vmatprep.subr.mxu0 0.0
        %1319 = vmatpush2.msra.mxu0 0.0
        %1320 = vmatprep.subr.mxu0 0.0
        %1321 = vmatpush2.msra.mxu0 0.0
        %1322 = vmatprep.subr.mxu0 0.0
        %1323 = vmatpush2.msra.mxu0 0.0
        %1324 = vmatprep.subr.mxu0 0.0
        %1325 = vmatpush2.msra.mxu0 0.0
        %1326 = vmatprep.subr.mxu0 0.0
        %1327 = vmatpush2.msra.mxu0 0.0
        %1328 = vmatprep.subr.mxu0 0.0
        %1329 = vmatpush2.msra.mxu0 0.0
        %1330 = vmatprep.subr.mxu0 0.0
        %1331 = vmatpush2.msra.mxu0 0.0
        %1332 = vmatprep.subr.mxu0 0.0
        %1333 = vmatpush2.msra.mxu0 0.0
        %1334 = vmatprep.subr.mxu0 0.0
        %1335 = vmatpush2.msra.mxu0 0.0
        %1336 = vmatprep.mubr.f32.mxu0 0.0
        %1337 = vmatmul.mubr.f32.gmra.mxu0 %v1104
        %v1338 = vpop.f32.mrf.mxu0
        %v1339 = vadd.f32 %v1270, %v1338
        %v1340 = vpop.f32.mrf.mxu0
        %1341 = vdwg.mxu0
        %s1342 = scalar_lea.vmem %s3, 96
        %v1343 = vld [vmem:[%s1342] sm:$0xff]
        %v1344 = vld [vmem:[%s1342 + $0x8] sm:$0xff]
        %v1345 = vld [vmem:[%s1342 + $0x10] sm:$0xff]
        %v1346 = vld [vmem:[%s1342 + $0x18] sm:$0xff]
        %s1347 = scalar_lea.vmem %s5, 3
        %v1348 = vld [vmem:[%s1347] sm:$0x1]
        %v1350 = vlaneseq
        %v1351 = vshrl.u32 %v1350, 7
        %v1352 = vsub.s32 0, %v1351
        %v1353 = vrot.slane %v1348, %v1352
        %1355 = vmatprep.subr.mxu0 0.0
        %1356 = vmatpush1.msra.mxu0 0.0
        %1357 = vmatprep.subr.mxu0 0.0
        %1358 = vmatpush1.msra.mxu0 0.0
        %1359 = vmatprep.subr.mxu0 0.0
        %1360 = vmatpush1.msra.mxu0 0.0
        %1361 = vmatprep.subr.mxu0 0.0
        %1362 = vmatpush1.msra.mxu0 0.0
        %1363 = vmatprep.subr.mxu0 0.0
        %1364 = vmatpush1.msra.mxu0 0.0
        %1365 = vmatprep.subr.mxu0 0.0
        %1366 = vmatpush1.msra.mxu0 0.0
        %1367 = vmatprep.subr.mxu0 0.0
        %1368 = vmatpush1.msra.mxu0 0.0
        %1369 = vmatprep.subr.mxu0 0.0
        %1370 = vmatpush1.msra.mxu0 0.0
        %1371 = vmatprep.subr.mxu0 0.0
        %1372 = vmatpush1.msra.mxu0 0.0
        %1373 = vmatprep.subr.mxu0 0.0
        %1374 = vmatpush1.msra.mxu0 0.0
        %1375 = vmatprep.subr.mxu0 0.0
        %1376 = vmatpush1.msra.mxu0 0.0
        %1377 = vmatprep.subr.mxu0 0.0
        %1378 = vmatpush1.msra.mxu0 0.0
        %1379 = vmatprep.subr.mxu0 0.0
        %1380 = vmatpush1.msra.mxu0 %v1346
        %1381 = vmatprep.subr.mxu0 0.0
        %1382 = vmatpush1.msra.mxu0 %v1345
        %1383 = vmatprep.subr.mxu0 0.0
        %1384 = vmatpush1.msra.mxu0 %v1344
        %1385 = vmatprep.subr.mxu0 0.0
        %1386 = vmatpush1.msra.mxu0 %v1343
        %1387 = vmatprep.subr.mxu0 0.0
        %1388 = vmatpush2.msra.mxu0 0.0
        %1389 = vmatprep.subr.mxu0 0.0
        %1390 = vmatpush2.msra.mxu0 0.0
        %1391 = vmatprep.subr.mxu0 0.0
        %1392 = vmatpush2.msra.mxu0 0.0
        %1393 = vmatprep.subr.mxu0 0.0
        %1394 = vmatpush2.msra.mxu0 0.0
        %1395 = vmatprep.subr.mxu0 0.0
        %1396 = vmatpush2.msra.mxu0 0.0
        %1397 = vmatprep.subr.mxu0 0.0
        %1398 = vmatpush2.msra.mxu0 0.0
        %1399 = vmatprep.subr.mxu0 0.0
        %1400 = vmatpush2.msra.mxu0 0.0
        %1401 = vmatprep.subr.mxu0 0.0
        %1402 = vmatpush2.msra.mxu0 0.0
        %1403 = vmatprep.subr.mxu0 0.0
        %1404 = vmatpush2.msra.mxu0 0.0
        %1405 = vmatprep.subr.mxu0 0.0
        %1406 = vmatpush2.msra.mxu0 0.0
        %1407 = vmatprep.subr.mxu0 0.0
        %1408 = vmatpush2.msra.mxu0 0.0
        %1409 = vmatprep.subr.mxu0 0.0
        %1410 = vmatpush2.msra.mxu0 0.0
        %1411 = vmatprep.subr.mxu0 0.0
        %1412 = vmatpush2.msra.mxu0 0.0
        %1413 = vmatprep.subr.mxu0 0.0
        %1414 = vmatpush2.msra.mxu0 0.0
        %1415 = vmatprep.subr.mxu0 0.0
        %1416 = vmatpush2.msra.mxu0 0.0
        %1417 = vmatprep.subr.mxu0 0.0
        %1418 = vmatpush2.msra.mxu0 0.0
        %1419 = vmatprep.mubr.f32.mxu0 0.0
        %1420 = vmatmul.mubr.f32.gmra.mxu0 %v1104
        %v1421 = vpop.f32.mrf.mxu0
        %v1422 = vadd.f32 %v1353, %v1421
        %v1423 = vpop.f32.mrf.mxu0
        %1424 = vdwg.mxu0
        %v1425 = vld [vmem:[#allocation2] sm:$0xff]
        %v1426 = vld [vmem:[#allocation2 + $0x8] sm:$0xff]
        %v1427 = vld [vmem:[#allocation2 + $0x10] sm:$0xff]
        %v1428 = vld [vmem:[#allocation2 + $0x18] sm:$0xff]
        %v1429 = vld [vmem:[#allocation2 + $0x20] sm:$0xff]
        %v1430 = vld [vmem:[#allocation2 + $0x28] sm:$0xff]
        %v1431 = vld [vmem:[#allocation2 + $0x30] sm:$0xff]
        %v1432 = vld [vmem:[#allocation2 + $0x38] sm:$0xff]
        %vm1433 = vcmask 64512
        %v1435 = vsel %vm1433, %v1173, 0
        %v1438 = vsel %vm1433, %v1425, 0
        %v1441 = vsel %vm1433, %v1426, 0
        %1443 = vmatprep.subr.mxu0 0.0
        %1444 = vmatpush1.xpose.msra.mxu0 0.0
        %1445 = vmatprep.subr.mxu0 0.0
        %1446 = vmatpush1.xpose.msra.mxu0 0.0
        %1447 = vmatprep.subr.mxu0 0.0
        %1448 = vmatpush1.xpose.msra.mxu0 0.0
        %1449 = vmatprep.subr.mxu0 0.0
        %1450 = vmatpush1.xpose.msra.mxu0 0.0
        %1451 = vmatprep.subr.mxu0 0.0
        %1452 = vmatpush1.xpose.msra.mxu0 0.0
        %1453 = vmatprep.subr.mxu0 0.0
        %1454 = vmatpush1.xpose.msra.mxu0 0.0
        %1455 = vmatprep.subr.mxu0 0.0
        %1456 = vmatpush1.xpose.msra.mxu0 0.0
        %1457 = vmatprep.subr.mxu0 0.0
        %1458 = vmatpush1.xpose.msra.mxu0 0.0
        %1459 = vmatprep.subr.mxu0 0.0
        %1460 = vmatpush1.xpose.msra.mxu0 0.0
        %1461 = vmatprep.subr.mxu0 0.0
        %1462 = vmatpush1.xpose.msra.mxu0 0.0
        %1463 = vmatprep.subr.mxu0 0.0
        %1464 = vmatpush1.xpose.msra.mxu0 0.0
        %1465 = vmatprep.subr.mxu0 0.0
        %1466 = vmatpush1.xpose.msra.mxu0 0.0
        %1467 = vmatprep.subr.mxu0 0.0
        %1468 = vmatpush1.xpose.msra.mxu0 0.0
        %1469 = vmatprep.subr.mxu0 0.0
        %1470 = vmatpush1.xpose.msra.mxu0 0.0
        %1471 = vmatprep.subr.mxu0 0.0
        %1472 = vmatpush1.xpose.msra.mxu0 %v1441
        %1473 = vmatprep.subr.mxu0 0.0
        %1474 = vmatpush1.xpose.msra.mxu0 %v1438
        %1475 = vmatprep.subr.mxu0 0.0
        %1476 = vmatpush2.xpose.msra.mxu0 0.0
        %1477 = vmatprep.subr.mxu0 0.0
        %1478 = vmatpush2.xpose.msra.mxu0 0.0
        %1479 = vmatprep.subr.mxu0 0.0
        %1480 = vmatpush2.xpose.msra.mxu0 0.0
        %1481 = vmatprep.subr.mxu0 0.0
        %1482 = vmatpush2.xpose.msra.mxu0 0.0
        %1483 = vmatprep.subr.mxu0 0.0
        %1484 = vmatpush2.xpose.msra.mxu0 0.0
        %1485 = vmatprep.subr.mxu0 0.0
        %1486 = vmatpush2.xpose.msra.mxu0 0.0
        %1487 = vmatprep.subr.mxu0 0.0
        %1488 = vmatpush2.xpose.msra.mxu0 0.0
        %1489 = vmatprep.subr.mxu0 0.0
        %1490 = vmatpush2.xpose.msra.mxu0 0.0
        %1491 = vmatprep.subr.mxu0 0.0
        %1492 = vmatpush2.xpose.msra.mxu0 0.0
        %1493 = vmatprep.subr.mxu0 0.0
        %1494 = vmatpush2.xpose.msra.mxu0 0.0
        %1495 = vmatprep.subr.mxu0 0.0
        %1496 = vmatpush2.xpose.msra.mxu0 0.0
        %1497 = vmatprep.subr.mxu0 0.0
        %1498 = vmatpush2.xpose.msra.mxu0 0.0
        %1499 = vmatprep.subr.mxu0 0.0
        %1500 = vmatpush2.xpose.msra.mxu0 0.0
        %1501 = vmatprep.subr.mxu0 0.0
        %1502 = vmatpush2.xpose.msra.mxu0 0.0
        %1503 = vmatprep.subr.mxu0 0.0
        %1504 = vmatpush2.xpose.msra.mxu0 0.0
        %1505 = vmatprep.subr.mxu0 0.0
        %1506 = vmatpush2.xpose.msra.mxu0 0.0
        %1507 = vmatprep.mubr.f32.mxu0 0.0
        %1508 = vmatmul.mubr.f32.gmra.mxu0 %v1435
        %v1509 = vpop.f32.mrf.mxu0
        %v1510 = vadd.f32 0.0, %v1509
        %v1511 = vpop.f32.mrf.mxu0
        %1512 = vdwg.mxu0
        %v1514 = vsel %vm1433, %v1256, 0
        %v1517 = vsel %vm1433, %v1427, 0
        %v1520 = vsel %vm1433, %v1428, 0
        %1522 = vmatprep.subr.mxu0 0.0
        %1523 = vmatpush1.xpose.msra.mxu0 0.0
        %1524 = vmatprep.subr.mxu0 0.0
        %1525 = vmatpush1.xpose.msra.mxu0 0.0
        %1526 = vmatprep.subr.mxu0 0.0
        %1527 = vmatpush1.xpose.msra.mxu0 0.0
        %1528 = vmatprep.subr.mxu0 0.0
        %1529 = vmatpush1.xpose.msra.mxu0 0.0
        %1530 = vmatprep.subr.mxu0 0.0
        %1531 = vmatpush1.xpose.msra.mxu0 0.0
        %1532 = vmatprep.subr.mxu0 0.0
        %1533 = vmatpush1.xpose.msra.mxu0 0.0
        %1534 = vmatprep.subr.mxu0 0.0
        %1535 = vmatpush1.xpose.msra.mxu0 0.0
        %1536 = vmatprep.subr.mxu0 0.0
        %1537 = vmatpush1.xpose.msra.mxu0 0.0
        %1538 = vmatprep.subr.mxu0 0.0
        %1539 = vmatpush1.xpose.msra.mxu0 0.0
        %1540 = vmatprep.subr.mxu0 0.0
        %1541 = vmatpush1.xpose.msra.mxu0 0.0
        %1542 = vmatprep.subr.mxu0 0.0
        %1543 = vmatpush1.xpose.msra.mxu0 0.0
        %1544 = vmatprep.subr.mxu0 0.0
        %1545 = vmatpush1.xpose.msra.mxu0 0.0
        %1546 = vmatprep.subr.mxu0 0.0
        %1547 = vmatpush1.xpose.msra.mxu0 0.0
        %1548 = vmatprep.subr.mxu0 0.0
        %1549 = vmatpush1.xpose.msra.mxu0 0.0
        %1550 = vmatprep.subr.mxu0 0.0
        %1551 = vmatpush1.xpose.msra.mxu0 %v1520
        %1552 = vmatprep.subr.mxu0 0.0
        %1553 = vmatpush1.xpose.msra.mxu0 %v1517
        %1554 = vmatprep.subr.mxu0 0.0
        %1555 = vmatpush2.xpose.msra.mxu0 0.0
        %1556 = vmatprep.subr.mxu0 0.0
        %1557 = vmatpush2.xpose.msra.mxu0 0.0
        %1558 = vmatprep.subr.mxu0 0.0
        %1559 = vmatpush2.xpose.msra.mxu0 0.0
        %1560 = vmatprep.subr.mxu0 0.0
        %1561 = vmatpush2.xpose.msra.mxu0 0.0
        %1562 = vmatprep.subr.mxu0 0.0
        %1563 = vmatpush2.xpose.msra.mxu0 0.0
        %1564 = vmatprep.subr.mxu0 0.0
        %1565 = vmatpush2.xpose.msra.mxu0 0.0
        %1566 = vmatprep.subr.mxu0 0.0
        %1567 = vmatpush2.xpose.msra.mxu0 0.0
        %1568 = vmatprep.subr.mxu0 0.0
        %1569 = vmatpush2.xpose.msra.mxu0 0.0
        %1570 = vmatprep.subr.mxu0 0.0
        %1571 = vmatpush2.xpose.msra.mxu0 0.0
        %1572 = vmatprep.subr.mxu0 0.0
        %1573 = vmatpush2.xpose.msra.mxu0 0.0
        %1574 = vmatprep.subr.mxu0 0.0
        %1575 = vmatpush2.xpose.msra.mxu0 0.0
        %1576 = vmatprep.subr.mxu0 0.0
        %1577 = vmatpush2.xpose.msra.mxu0 0.0
        %1578 = vmatprep.subr.mxu0 0.0
        %1579 = vmatpush2.xpose.msra.mxu0 0.0
        %1580 = vmatprep.subr.mxu0 0.0
        %1581 = vmatpush2.xpose.msra.mxu0 0.0
        %1582 = vmatprep.subr.mxu0 0.0
        %1583 = vmatpush2.xpose.msra.mxu0 0.0
        %1584 = vmatprep.subr.mxu0 0.0
        %1585 = vmatpush2.xpose.msra.mxu0 0.0
        %1586 = vmatprep.mubr.f32.mxu0 0.0
        %1587 = vmatmul.mubr.f32.gmra.mxu0 %v1514
        %v1588 = vpop.f32.mrf.mxu0
        %v1589 = vadd.f32 0.0, %v1588
        %v1590 = vpop.f32.mrf.mxu0
        %1591 = vdwg.mxu0
        %v1593 = vsel %vm1433, %v1339, 0
        %v1596 = vsel %vm1433, %v1429, 0
        %v1599 = vsel %vm1433, %v1430, 0
        %1601 = vmatprep.subr.mxu0 0.0
        %1602 = vmatpush1.xpose.msra.mxu0 0.0
        %1603 = vmatprep.subr.mxu0 0.0
        %1604 = vmatpush1.xpose.msra.mxu0 0.0
        %1605 = vmatprep.subr.mxu0 0.0
        %1606 = vmatpush1.xpose.msra.mxu0 0.0
        %1607 = vmatprep.subr.mxu0 0.0
        %1608 = vmatpush1.xpose.msra.mxu0 0.0
        %1609 = vmatprep.subr.mxu0 0.0
        %1610 = vmatpush1.xpose.msra.mxu0 0.0
        %1611 = vmatprep.subr.mxu0 0.0
        %1612 = vmatpush1.xpose.msra.mxu0 0.0
        %1613 = vmatprep.subr.mxu0 0.0
        %1614 = vmatpush1.xpose.msra.mxu0 0.0
        %1615 = vmatprep.subr.mxu0 0.0
        %1616 = vmatpush1.xpose.msra.mxu0 0.0
        %1617 = vmatprep.subr.mxu0 0.0
        %1618 = vmatpush1.xpose.msra.mxu0 0.0
        %1619 = vmatprep.subr.mxu0 0.0
        %1620 = vmatpush1.xpose.msra.mxu0 0.0
        %1621 = vmatprep.subr.mxu0 0.0
        %1622 = vmatpush1.xpose.msra.mxu0 0.0
        %1623 = vmatprep.subr.mxu0 0.0
        %1624 = vmatpush1.xpose.msra.mxu0 0.0
        %1625 = vmatprep.subr.mxu0 0.0
        %1626 = vmatpush1.xpose.msra.mxu0 0.0
        %1627 = vmatprep.subr.mxu0 0.0
        %1628 = vmatpush1.xpose.msra.mxu0 0.0
        %1629 = vmatprep.subr.mxu0 0.0
        %1630 = vmatpush1.xpose.msra.mxu0 %v1599
        %1631 = vmatprep.subr.mxu0 0.0
        %1632 = vmatpush1.xpose.msra.mxu0 %v1596
        %1633 = vmatprep.subr.mxu0 0.0
        %1634 = vmatpush2.xpose.msra.mxu0 0.0
        %1635 = vmatprep.subr.mxu0 0.0
        %1636 = vmatpush2.xpose.msra.mxu0 0.0
        %1637 = vmatprep.subr.mxu0 0.0
        %1638 = vmatpush2.xpose.msra.mxu0 0.0
        %1639 = vmatprep.subr.mxu0 0.0
        %1640 = vmatpush2.xpose.msra.mxu0 0.0
        %1641 = vmatprep.subr.mxu0 0.0
        %1642 = vmatpush2.xpose.msra.mxu0 0.0
        %1643 = vmatprep.subr.mxu0 0.0
        %1644 = vmatpush2.xpose.msra.mxu0 0.0
        %1645 = vmatprep.subr.mxu0 0.0
        %1646 = vmatpush2.xpose.msra.mxu0 0.0
        %1647 = vmatprep.subr.mxu0 0.0
        %1648 = vmatpush2.xpose.msra.mxu0 0.0
        %1649 = vmatprep.subr.mxu0 0.0
        %1650 = vmatpush2.xpose.msra.mxu0 0.0
        %1651 = vmatprep.subr.mxu0 0.0
        %1652 = vmatpush2.xpose.msra.mxu0 0.0
        %1653 = vmatprep.subr.mxu0 0.0
        %1654 = vmatpush2.xpose.msra.mxu0 0.0
        %1655 = vmatprep.subr.mxu0 0.0
        %1656 = vmatpush2.xpose.msra.mxu0 0.0
        %1657 = vmatprep.subr.mxu0 0.0
        %1658 = vmatpush2.xpose.msra.mxu0 0.0
        %1659 = vmatprep.subr.mxu0 0.0
        %1660 = vmatpush2.xpose.msra.mxu0 0.0
        %1661 = vmatprep.subr.mxu0 0.0
        %1662 = vmatpush2.xpose.msra.mxu0 0.0
        %1663 = vmatprep.subr.mxu0 0.0
        %1664 = vmatpush2.xpose.msra.mxu0 0.0
        %1665 = vmatprep.mubr.f32.mxu0 0.0
        %1666 = vmatmul.mubr.f32.gmra.mxu0 %v1593
        %v1667 = vpop.f32.mrf.mxu0
        %v1668 = vadd.f32 0.0, %v1667
        %v1669 = vpop.f32.mrf.mxu0
        %1670 = vdwg.mxu0
        %v1672 = vsel %vm1433, %v1422, 0
        %v1675 = vsel %vm1433, %v1431, 0
        %v1678 = vsel %vm1433, %v1432, 0
        %1680 = vmatprep.subr.mxu0 0.0
        %1681 = vmatpush1.xpose.msra.mxu0 0.0
        %1682 = vmatprep.subr.mxu0 0.0
        %1683 = vmatpush1.xpose.msra.mxu0 0.0
        %1684 = vmatprep.subr.mxu0 0.0
        %1685 = vmatpush1.xpose.msra.mxu0 0.0
        %1686 = vmatprep.subr.mxu0 0.0
        %1687 = vmatpush1.xpose.msra.mxu0 0.0
        %1688 = vmatprep.subr.mxu0 0.0
        %1689 = vmatpush1.xpose.msra.mxu0 0.0
        %1690 = vmatprep.subr.mxu0 0.0
        %1691 = vmatpush1.xpose.msra.mxu0 0.0
        %1692 = vmatprep.subr.mxu0 0.0
        %1693 = vmatpush1.xpose.msra.mxu0 0.0
        %1694 = vmatprep.subr.mxu0 0.0
        %1695 = vmatpush1.xpose.msra.mxu0 0.0
        %1696 = vmatprep.subr.mxu0 0.0
        %1697 = vmatpush1.xpose.msra.mxu0 0.0
        %1698 = vmatprep.subr.mxu0 0.0
        %1699 = vmatpush1.xpose.msra.mxu0 0.0
        %1700 = vmatprep.subr.mxu0 0.0
        %1701 = vmatpush1.xpose.msra.mxu0 0.0
        %1702 = vmatprep.subr.mxu0 0.0
        %1703 = vmatpush1.xpose.msra.mxu0 0.0
        %1704 = vmatprep.subr.mxu0 0.0
        %1705 = vmatpush1.xpose.msra.mxu0 0.0
        %1706 = vmatprep.subr.mxu0 0.0
        %1707 = vmatpush1.xpose.msra.mxu0 0.0
        %1708 = vmatprep.subr.mxu0 0.0
        %1709 = vmatpush1.xpose.msra.mxu0 %v1678
        %1710 = vmatprep.subr.mxu0 0.0
        %1711 = vmatpush1.xpose.msra.mxu0 %v1675
        %1712 = vmatprep.subr.mxu0 0.0
        %1713 = vmatpush2.xpose.msra.mxu0 0.0
        %1714 = vmatprep.subr.mxu0 0.0
        %1715 = vmatpush2.xpose.msra.mxu0 0.0
        %1716 = vmatprep.subr.mxu0 0.0
        %1717 = vmatpush2.xpose.msra.mxu0 0.0
        %1718 = vmatprep.subr.mxu0 0.0
        %1719 = vmatpush2.xpose.msra.mxu0 0.0
        %1720 = vmatprep.subr.mxu0 0.0
        %1721 = vmatpush2.xpose.msra.mxu0 0.0
        %1722 = vmatprep.subr.mxu0 0.0
        %1723 = vmatpush2.xpose.msra.mxu0 0.0
        %1724 = vmatprep.subr.mxu0 0.0
        %1725 = vmatpush2.xpose.msra.mxu0 0.0
        %1726 = vmatprep.subr.mxu0 0.0
        %1727 = vmatpush2.xpose.msra.mxu0 0.0
        %1728 = vmatprep.subr.mxu0 0.0
        %1729 = vmatpush2.xpose.msra.mxu0 0.0
        %1730 = vmatprep.subr.mxu0 0.0
        %1731 = vmatpush2.xpose.msra.mxu0 0.0
        %1732 = vmatprep.subr.mxu0 0.0
        %1733 = vmatpush2.xpose.msra.mxu0 0.0
        %1734 = vmatprep.subr.mxu0 0.0
        %1735 = vmatpush2.xpose.msra.mxu0 0.0
        %1736 = vmatprep.subr.mxu0 0.0
        %1737 = vmatpush2.xpose.msra.mxu0 0.0
        %1738 = vmatprep.subr.mxu0 0.0
        %1739 = vmatpush2.xpose.msra.mxu0 0.0
        %1740 = vmatprep.subr.mxu0 0.0
        %1741 = vmatpush2.xpose.msra.mxu0 0.0
        %1742 = vmatprep.subr.mxu0 0.0
        %1743 = vmatpush2.xpose.msra.mxu0 0.0
        %1744 = vmatprep.mubr.f32.mxu0 0.0
        %1745 = vmatmul.mubr.f32.gmra.mxu0 %v1672
        %v1746 = vpop.f32.mrf.mxu0
        %v1747 = vadd.f32 0.0, %v1746
        %v1748 = vpop.f32.mrf.mxu0
        %1749 = vdwg.mxu0
        %vm1750 = vcmask 130048
        %v1751 = vsel %vm1750, %v1510, -inf
        %1752 = vmax.xlane.f32.xlu0 %v1751
        %v1753 = vpop.xlane.xlu0 %1752
        %v1754 = vsel %vm1750, %v1589, -inf
        %1755 = vmax.xlane.f32.xlu0 %v1754
        %v1756 = vpop.xlane.xlu0 %1755
        %v1757 = vsel %vm1750, %v1668, -inf
        %1758 = vmax.xlane.f32.xlu0 %v1757
        %v1759 = vpop.xlane.xlu0 %1758
        %v1760 = vsel %vm1750, %v1747, -inf
        %1761 = vmax.xlane.f32.xlu0 %v1760
        %v1762 = vpop.xlane.xlu0 %1761
        %v1763 = vsub.f32 %v1510, %v1753
        %v1764 = vsub.f32 %v1589, %v1756
        %v1765 = vsub.f32 %v1668, %v1759
        %v1766 = vsub.f32 %v1747, %v1762
        %v1767 = vmul.f32 %v1763, 1.442695
        %v1768 = vpow.pop %v1767
        %v1769 = vmul.f32 %v1764, 1.442695
        %v1770 = vpow.pop %v1769
        %v1771 = vmul.f32 %v1765, 1.442695
        %v1772 = vpow.pop %v1771
        %v1773 = vmul.f32 %v1766, 1.442695
        %v1774 = vpow.pop %v1773
        %v1775 = vsel %vm1750, %v1768, 0.0
        %1776 = vadd.xlane.f32.xlu0 %v1775
        %v1777 = vpop.xlane.xlu0 %1776
        %v1778 = vsel %vm1750, %v1770, 0.0
        %1779 = vadd.xlane.f32.xlu0 %v1778
        %v1780 = vpop.xlane.xlu0 %1779
        %v1781 = vsel %vm1750, %v1772, 0.0
        %1782 = vadd.xlane.f32.xlu0 %v1781
        %v1783 = vpop.xlane.xlu0 %1782
        %v1784 = vsel %vm1750, %v1774, 0.0
        %1785 = vadd.xlane.f32.xlu0 %v1784
        %v1786 = vpop.xlane.xlu0 %1785
        %v1787 = vld [vmem:[#allocation3] sm:$0xff]
        %v1788 = vld [vmem:[#allocation3 + $0x8] sm:$0xff]
        %v1789 = vld [vmem:[#allocation3 + $0x10] sm:$0xff]
        %v1790 = vld [vmem:[#allocation3 + $0x18] sm:$0xff]
        %v1791 = vld [vmem:[#allocation3 + $0x20] sm:$0xff]
        %v1792 = vld [vmem:[#allocation3 + $0x28] sm:$0xff]
        %v1793 = vld [vmem:[#allocation3 + $0x30] sm:$0xff]
        %v1794 = vld [vmem:[#allocation3 + $0x38] sm:$0xff]
        %v1796 = vsel %vm1750, %v1768, 0
        %1798 = vmatprep.subr.mxu0 0.0
        %1799 = vmatpush1.msra.mxu0 0.0
        %1800 = vmatprep.subr.mxu0 0.0
        %1801 = vmatpush1.msra.mxu0 0.0
        %1802 = vmatprep.subr.mxu0 0.0
        %1803 = vmatpush1.msra.mxu0 0.0
        %1804 = vmatprep.subr.mxu0 0.0
        %1805 = vmatpush1.msra.mxu0 0.0
        %1806 = vmatprep.subr.mxu0 0.0
        %1807 = vmatpush1.msra.mxu0 0.0
        %1808 = vmatprep.subr.mxu0 0.0
        %1809 = vmatpush1.msra.mxu0 0.0
        %1810 = vmatprep.subr.mxu0 0.0
        %1811 = vmatpush1.msra.mxu0 0.0
        %1812 = vmatprep.subr.mxu0 0.0
        %1813 = vmatpush1.msra.mxu0 0.0
        %1814 = vmatprep.subr.mxu0 0.0
        %1815 = vmatpush1.msra.mxu0 0.0
        %1816 = vmatprep.subr.mxu0 0.0
        %1817 = vmatpush1.msra.mxu0 0.0
        %1818 = vmatprep.subr.mxu0 0.0
        %1819 = vmatpush1.msra.mxu0 0.0
        %1820 = vmatprep.subr.mxu0 0.0
        %1821 = vmatpush1.msra.mxu0 0.0
        %1822 = vmatprep.subr.mxu0 0.0
        %1823 = vmatpush1.msra.mxu0 0.0
        %1824 = vmatprep.subr.mxu0 0.0
        %1825 = vmatpush1.msra.mxu0 0.0
        %1826 = vmatprep.subr.mxu0 0.0
        %1827 = vmatpush1.msra.mxu0 %v1788
        %1828 = vmatprep.subr.mxu0 0.0
        %1829 = vmatpush1.msra.mxu0 %v1787
        %1830 = vmatprep.subr.mxu0 0.0
        %1831 = vmatpush2.msra.mxu0 0.0
        %1832 = vmatprep.subr.mxu0 0.0
        %1833 = vmatpush2.msra.mxu0 0.0
        %1834 = vmatprep.subr.mxu0 0.0
        %1835 = vmatpush2.msra.mxu0 0.0
        %1836 = vmatprep.subr.mxu0 0.0
        %1837 = vmatpush2.msra.mxu0 0.0
        %1838 = vmatprep.subr.mxu0 0.0
        %1839 = vmatpush2.msra.mxu0 0.0
        %1840 = vmatprep.subr.mxu0 0.0
        %1841 = vmatpush2.msra.mxu0 0.0
        %1842 = vmatprep.subr.mxu0 0.0
        %1843 = vmatpush2.msra.mxu0 0.0
        %1844 = vmatprep.subr.mxu0 0.0
        %1845 = vmatpush2.msra.mxu0 0.0
        %1846 = vmatprep.subr.mxu0 0.0
        %1847 = vmatpush2.msra.mxu0 0.0
        %1848 = vmatprep.subr.mxu0 0.0
        %1849 = vmatpush2.msra.mxu0 0.0
        %1850 = vmatprep.subr.mxu0 0.0
        %1851 = vmatpush2.msra.mxu0 0.0
        %1852 = vmatprep.subr.mxu0 0.0
        %1853 = vmatpush2.msra.mxu0 0.0
        %1854 = vmatprep.subr.mxu0 0.0
        %1855 = vmatpush2.msra.mxu0 0.0
        %1856 = vmatprep.subr.mxu0 0.0
        %1857 = vmatpush2.msra.mxu0 0.0
        %1858 = vmatprep.subr.mxu0 0.0
        %1859 = vmatpush2.msra.mxu0 0.0
        %1860 = vmatprep.subr.mxu0 0.0
        %1861 = vmatpush2.msra.mxu0 0.0
        %1862 = vmatprep.mubr.f32.mxu0 0.0
        %1863 = vmatmul.mubr.f32.gmra.mxu0 %v1796
        %v1864 = vpop.f32.mrf.mxu0
        %v1865 = vadd.f32 0.0, %v1864
        %v1866 = vpop.f32.mrf.mxu0
        %1867 = vdwg.mxu0
        %v1869 = vsel %vm1750, %v1770, 0
        %1871 = vmatprep.subr.mxu0 0.0
        %1872 = vmatpush1.msra.mxu0 0.0
        %1873 = vmatprep.subr.mxu0 0.0
        %1874 = vmatpush1.msra.mxu0 0.0
        %1875 = vmatprep.subr.mxu0 0.0
        %1876 = vmatpush1.msra.mxu0 0.0
        %1877 = vmatprep.subr.mxu0 0.0
        %1878 = vmatpush1.msra.mxu0 0.0
        %1879 = vmatprep.subr.mxu0 0.0
        %1880 = vmatpush1.msra.mxu0 0.0
        %1881 = vmatprep.subr.mxu0 0.0
        %1882 = vmatpush1.msra.mxu0 0.0
        %1883 = vmatprep.subr.mxu0 0.0
        %1884 = vmatpush1.msra.mxu0 0.0
        %1885 = vmatprep.subr.mxu0 0.0
        %1886 = vmatpush1.msra.mxu0 0.0
        %1887 = vmatprep.subr.mxu0 0.0
        %1888 = vmatpush1.msra.mxu0 0.0
        %1889 = vmatprep.subr.mxu0 0.0
        %1890 = vmatpush1.msra.mxu0 0.0
        %1891 = vmatprep.subr.mxu0 0.0
        %1892 = vmatpush1.msra.mxu0 0.0
        %1893 = vmatprep.subr.mxu0 0.0
        %1894 = vmatpush1.msra.mxu0 0.0
        %1895 = vmatprep.subr.mxu0 0.0
        %1896 = vmatpush1.msra.mxu0 0.0
        %1897 = vmatprep.subr.mxu0 0.0
        %1898 = vmatpush1.msra.mxu0 0.0
        %1899 = vmatprep.subr.mxu0 0.0
        %1900 = vmatpush1.msra.mxu0 %v1790
        %1901 = vmatprep.subr.mxu0 0.0
        %1902 = vmatpush1.msra.mxu0 %v1789
        %1903 = vmatprep.subr.mxu0 0.0
        %1904 = vmatpush2.msra.mxu0 0.0
        %1905 = vmatprep.subr.mxu0 0.0
        %1906 = vmatpush2.msra.mxu0 0.0
        %1907 = vmatprep.subr.mxu0 0.0
        %1908 = vmatpush2.msra.mxu0 0.0
        %1909 = vmatprep.subr.mxu0 0.0
        %1910 = vmatpush2.msra.mxu0 0.0
        %1911 = vmatprep.subr.mxu0 0.0
        %1912 = vmatpush2.msra.mxu0 0.0
        %1913 = vmatprep.subr.mxu0 0.0
        %1914 = vmatpush2.msra.mxu0 0.0
        %1915 = vmatprep.subr.mxu0 0.0
        %1916 = vmatpush2.msra.mxu0 0.0
        %1917 = vmatprep.subr.mxu0 0.0
        %1918 = vmatpush2.msra.mxu0 0.0
        %1919 = vmatprep.subr.mxu0 0.0
        %1920 = vmatpush2.msra.mxu0 0.0
        %1921 = vmatprep.subr.mxu0 0.0
        %1922 = vmatpush2.msra.mxu0 0.0
        %1923 = vmatprep.subr.mxu0 0.0
        %1924 = vmatpush2.msra.mxu0 0.0
        %1925 = vmatprep.subr.mxu0 0.0
        %1926 = vmatpush2.msra.mxu0 0.0
        %1927 = vmatprep.subr.mxu0 0.0
        %1928 = vmatpush2.msra.mxu0 0.0
        %1929 = vmatprep.subr.mxu0 0.0
        %1930 = vmatpush2.msra.mxu0 0.0
        %1931 = vmatprep.subr.mxu0 0.0
        %1932 = vmatpush2.msra.mxu0 0.0
        %1933 = vmatprep.subr.mxu0 0.0
        %1934 = vmatpush2.msra.mxu0 0.0
        %1935 = vmatprep.mubr.f32.mxu0 0.0
        %1936 = vmatmul.mubr.f32.gmra.mxu0 %v1869
        %v1937 = vpop.f32.mrf.mxu0
        %v1938 = vadd.f32 0.0, %v1937
        %v1939 = vpop.f32.mrf.mxu0
        %1940 = vdwg.mxu0
        %v1942 = vsel %vm1750, %v1772, 0
        %1944 = vmatprep.subr.mxu0 0.0
        %1945 = vmatpush1.msra.mxu0 0.0
        %1946 = vmatprep.subr.mxu0 0.0
        %1947 = vmatpush1.msra.mxu0 0.0
        %1948 = vmatprep.subr.mxu0 0.0
        %1949 = vmatpush1.msra.mxu0 0.0
        %1950 = vmatprep.subr.mxu0 0.0
        %1951 = vmatpush1.msra.mxu0 0.0
        %1952 = vmatprep.subr.mxu0 0.0
        %1953 = vmatpush1.msra.mxu0 0.0
        %1954 = vmatprep.subr.mxu0 0.0
        %1955 = vmatpush1.msra.mxu0 0.0
        %1956 = vmatprep.subr.mxu0 0.0
        %1957 = vmatpush1.msra.mxu0 0.0
        %1958 = vmatprep.subr.mxu0 0.0
        %1959 = vmatpush1.msra.mxu0 0.0
        %1960 = vmatprep.subr.mxu0 0.0
        %1961 = vmatpush1.msra.mxu0 0.0
        %1962 = vmatprep.subr.mxu0 0.0
        %1963 = vmatpush1.msra.mxu0 0.0
        %1964 = vmatprep.subr.mxu0 0.0
        %1965 = vmatpush1.msra.mxu0 0.0
        %1966 = vmatprep.subr.mxu0 0.0
        %1967 = vmatpush1.msra.mxu0 0.0
        %1968 = vmatprep.subr.mxu0 0.0
        %1969 = vmatpush1.msra.mxu0 0.0
        %1970 = vmatprep.subr.mxu0 0.0
        %1971 = vmatpush1.msra.mxu0 0.0
        %1972 = vmatprep.subr.mxu0 0.0
        %1973 = vmatpush1.msra.mxu0 %v1792
        %1974 = vmatprep.subr.mxu0 0.0
        %1975 = vmatpush1.msra.mxu0 %v1791
        %1976 = vmatprep.subr.mxu0 0.0
        %1977 = vmatpush2.msra.mxu0 0.0
        %1978 = vmatprep.subr.mxu0 0.0
        %1979 = vmatpush2.msra.mxu0 0.0
        %1980 = vmatprep.subr.mxu0 0.0
        %1981 = vmatpush2.msra.mxu0 0.0
        %1982 = vmatprep.subr.mxu0 0.0
        %1983 = vmatpush2.msra.mxu0 0.0
        %1984 = vmatprep.subr.mxu0 0.0
        %1985 = vmatpush2.msra.mxu0 0.0
        %1986 = vmatprep.subr.mxu0 0.0
        %1987 = vmatpush2.msra.mxu0 0.0
        %1988 = vmatprep.subr.mxu0 0.0
        %1989 = vmatpush2.msra.mxu0 0.0
        %1990 = vmatprep.subr.mxu0 0.0
        %1991 = vmatpush2.msra.mxu0 0.0
        %1992 = vmatprep.subr.mxu0 0.0
        %1993 = vmatpush2.msra.mxu0 0.0
        %1994 = vmatprep.subr.mxu0 0.0
        %1995 = vmatpush2.msra.mxu0 0.0
        %1996 = vmatprep.subr.mxu0 0.0
        %1997 = vmatpush2.msra.mxu0 0.0
        %1998 = vmatprep.subr.mxu0 0.0
        %1999 = vmatpush2.msra.mxu0 0.0
        %2000 = vmatprep.subr.mxu0 0.0
        %2001 = vmatpush2.msra.mxu0 0.0
        %2002 = vmatprep.subr.mxu0 0.0
        %2003 = vmatpush2.msra.mxu0 0.0
        %2004 = vmatprep.subr.mxu0 0.0
        %2005 = vmatpush2.msra.mxu0 0.0
        %2006 = vmatprep.subr.mxu0 0.0
        %2007 = vmatpush2.msra.mxu0 0.0
        %2008 = vmatprep.mubr.f32.mxu0 0.0
        %2009 = vmatmul.mubr.f32.gmra.mxu0 %v1942
        %v2010 = vpop.f32.mrf.mxu0
        %v2011 = vadd.f32 0.0, %v2010
        %v2012 = vpop.f32.mrf.mxu0
        %2013 = vdwg.mxu0
        %v2015 = vsel %vm1750, %v1774, 0
        %2017 = vmatprep.subr.mxu0 0.0
        %2018 = vmatpush1.msra.mxu0 0.0
        %2019 = vmatprep.subr.mxu0 0.0
        %2020 = vmatpush1.msra.mxu0 0.0
        %2021 = vmatprep.subr.mxu0 0.0
        %2022 = vmatpush1.msra.mxu0 0.0
        %2023 = vmatprep.subr.mxu0 0.0
        %2024 = vmatpush1.msra.mxu0 0.0
        %2025 = vmatprep.subr.mxu0 0.0
        %2026 = vmatpush1.msra.mxu0 0.0
        %2027 = vmatprep.subr.mxu0 0.0
        %2028 = vmatpush1.msra.mxu0 0.0
        %2029 = vmatprep.subr.mxu0 0.0
        %2030 = vmatpush1.msra.mxu0 0.0
        %2031 = vmatprep.subr.mxu0 0.0
        %2032 = vmatpush1.msra.mxu0 0.0
        %2033 = vmatprep.subr.mxu0 0.0
        %2034 = vmatpush1.msra.mxu0 0.0
        %2035 = vmatprep.subr.mxu0 0.0
        %2036 = vmatpush1.msra.mxu0 0.0
        %2037 = vmatprep.subr.mxu0 0.0
        %2038 = vmatpush1.msra.mxu0 0.0
        %2039 = vmatprep.subr.mxu0 0.0
        %2040 = vmatpush1.msra.mxu0 0.0
        %2041 = vmatprep.subr.mxu0 0.0
        %2042 = vmatpush1.msra.mxu0 0.0
        %2043 = vmatprep.subr.mxu0 0.0
        %2044 = vmatpush1.msra.mxu0 0.0
        %2045 = vmatprep.subr.mxu0 0.0
        %2046 = vmatpush1.msra.mxu0 %v1794
        %2047 = vmatprep.subr.mxu0 0.0
        %2048 = vmatpush1.msra.mxu0 %v1793
        %2049 = vmatprep.subr.mxu0 0.0
        %2050 = vmatpush2.msra.mxu0 0.0
        %2051 = vmatprep.subr.mxu0 0.0
        %2052 = vmatpush2.msra.mxu0 0.0
        %2053 = vmatprep.subr.mxu0 0.0
        %2054 = vmatpush2.msra.mxu0 0.0
        %2055 = vmatprep.subr.mxu0 0.0
        %2056 = vmatpush2.msra.mxu0 0.0
        %2057 = vmatprep.subr.mxu0 0.0
        %2058 = vmatpush2.msra.mxu0 0.0
        %2059 = vmatprep.subr.mxu0 0.0
        %2060 = vmatpush2.msra.mxu0 0.0
        %2061 = vmatprep.subr.mxu0 0.0
        %2062 = vmatpush2.msra.mxu0 0.0
        %2063 = vmatprep.subr.mxu0 0.0
        %2064 = vmatpush2.msra.mxu0 0.0
        %2065 = vmatprep.subr.mxu0 0.0
        %2066 = vmatpush2.msra.mxu0 0.0
        %2067 = vmatprep.subr.mxu0 0.0
        %2068 = vmatpush2.msra.mxu0 0.0
        %2069 = vmatprep.subr.mxu0 0.0
        %2070 = vmatpush2.msra.mxu0 0.0
        %2071 = vmatprep.subr.mxu0 0.0
        %2072 = vmatpush2.msra.mxu0 0.0
        %2073 = vmatprep.subr.mxu0 0.0
        %2074 = vmatpush2.msra.mxu0 0.0
        %2075 = vmatprep.subr.mxu0 0.0
        %2076 = vmatpush2.msra.mxu0 0.0
        %2077 = vmatprep.subr.mxu0 0.0
        %2078 = vmatpush2.msra.mxu0 0.0
        %2079 = vmatprep.subr.mxu0 0.0
        %2080 = vmatpush2.msra.mxu0 0.0
        %2081 = vmatprep.mubr.f32.mxu0 0.0
        %2082 = vmatmul.mubr.f32.gmra.mxu0 %v2015
        %v2083 = vpop.f32.mrf.mxu0
        %v2084 = vadd.f32 0.0, %v2083
        %v2085 = vpop.f32.mrf.mxu0
        %2086 = vdwg.mxu0
        %v2087 = vrcp.pop %v1777
        %v2088 = vrcp.pop %v1780
        %v2089 = vrcp.pop %v1783
        %v2090 = vrcp.pop %v1786
        %v2091 = vmul.f32 %v1865, %v2087
        %v2092 = vmul.f32 %v1938, %v2088
        %v2093 = vmul.f32 %v2011, %v2089
        %v2094 = vmul.f32 %v2084, %v2090
        %v2095 = vld [vmem:[%s4] sm:$0xff]
        %v2096 = vld [vmem:[%s4 + $0x8] sm:$0xff]
        %v2097 = vld [vmem:[%s4 + $0x10] sm:$0xff]
        %v2098 = vld [vmem:[%s4 + $0x18] sm:$0xff]
        %v2100 = vsel %vm1433, %v2091, 0
        %2102 = vmatprep.subr.mxu0 0.0
        %2103 = vmatpush1.msra.mxu0 0.0
        %2104 = vmatprep.subr.mxu0 0.0
        %2105 = vmatpush1.msra.mxu0 0.0
        %2106 = vmatprep.subr.mxu0 0.0
        %2107 = vmatpush1.msra.mxu0 0.0
        %2108 = vmatprep.subr.mxu0 0.0
        %2109 = vmatpush1.msra.mxu0 0.0
        %2110 = vmatprep.subr.mxu0 0.0
        %2111 = vmatpush1.msra.mxu0 0.0
        %2112 = vmatprep.subr.mxu0 0.0
        %2113 = vmatpush1.msra.mxu0 0.0
        %2114 = vmatprep.subr.mxu0 0.0
        %2115 = vmatpush1.msra.mxu0 0.0
        %2116 = vmatprep.subr.mxu0 0.0
        %2117 = vmatpush1.msra.mxu0 0.0
        %2118 = vmatprep.subr.mxu0 0.0
        %2119 = vmatpush1.msra.mxu0 0.0
        %2120 = vmatprep.subr.mxu0 0.0
        %2121 = vmatpush1.msra.mxu0 0.0
        %2122 = vmatprep.subr.mxu0 0.0
        %2123 = vmatpush1.msra.mxu0 0.0
        %2124 = vmatprep.subr.mxu0 0.0
        %2125 = vmatpush1.msra.mxu0 0.0
        %2126 = vmatprep.subr.mxu0 0.0
        %2127 = vmatpush1.msra.mxu0 0.0
        %2128 = vmatprep.subr.mxu0 0.0
        %2129 = vmatpush1.msra.mxu0 0.0
        %2130 = vmatprep.subr.mxu0 0.0
        %2131 = vmatpush1.msra.mxu0 0.0
        %2132 = vmatprep.subr.mxu0 0.0
        %2133 = vmatpush1.msra.mxu0 %v2095
        %2134 = vmatprep.subr.mxu0 0.0
        %2135 = vmatpush2.msra.mxu0 0.0
        %2136 = vmatprep.subr.mxu0 0.0
        %2137 = vmatpush2.msra.mxu0 0.0
        %2138 = vmatprep.subr.mxu0 0.0
        %2139 = vmatpush2.msra.mxu0 0.0
        %2140 = vmatprep.subr.mxu0 0.0
        %2141 = vmatpush2.msra.mxu0 0.0
        %2142 = vmatprep.subr.mxu0 0.0
        %2143 = vmatpush2.msra.mxu0 0.0
        %2144 = vmatprep.subr.mxu0 0.0
        %2145 = vmatpush2.msra.mxu0 0.0
        %2146 = vmatprep.subr.mxu0 0.0
        %2147 = vmatpush2.msra.mxu0 0.0
        %2148 = vmatprep.subr.mxu0 0.0
        %2149 = vmatpush2.msra.mxu0 0.0
        %2150 = vmatprep.subr.mxu0 0.0
        %2151 = vmatpush2.msra.mxu0 0.0
        %2152 = vmatprep.subr.mxu0 0.0
        %2153 = vmatpush2.msra.mxu0 0.0
        %2154 = vmatprep.subr.mxu0 0.0
        %2155 = vmatpush2.msra.mxu0 0.0
        %2156 = vmatprep.subr.mxu0 0.0
        %2157 = vmatpush2.msra.mxu0 0.0
        %2158 = vmatprep.subr.mxu0 0.0
        %2159 = vmatpush2.msra.mxu0 0.0
        %2160 = vmatprep.subr.mxu0 0.0
        %2161 = vmatpush2.msra.mxu0 0.0
        %2162 = vmatprep.subr.mxu0 0.0
        %2163 = vmatpush2.msra.mxu0 0.0
        %2164 = vmatprep.subr.mxu0 0.0
        %2165 = vmatpush2.msra.mxu0 0.0
        %2166 = vmatprep.mubr.f32.mxu0 0.0
        %2167 = vmatmul.mubr.f32.gmra.mxu0 %v2100
        %v2168 = vpop.f32.mrf.mxu0
        %v2169 = vadd.f32 0.0, %v2168
        %v2170 = vpop.f32.mrf.mxu0
        %2171 = vdwg.mxu0
        %v2173 = vsel %vm1433, %v2092, 0
        %2175 = vmatprep.subr.mxu0 0.0
        %2176 = vmatpush1.msra.mxu0 0.0
        %2177 = vmatprep.subr.mxu0 0.0
        %2178 = vmatpush1.msra.mxu0 0.0
        %2179 = vmatprep.subr.mxu0 0.0
        %2180 = vmatpush1.msra.mxu0 0.0
        %2181 = vmatprep.subr.mxu0 0.0
        %2182 = vmatpush1.msra.mxu0 0.0
        %2183 = vmatprep.subr.mxu0 0.0
        %2184 = vmatpush1.msra.mxu0 0.0
        %2185 = vmatprep.subr.mxu0 0.0
        %2186 = vmatpush1.msra.mxu0 0.0
        %2187 = vmatprep.subr.mxu0 0.0
        %2188 = vmatpush1.msra.mxu0 0.0
        %2189 = vmatprep.subr.mxu0 0.0
        %2190 = vmatpush1.msra.mxu0 0.0
        %2191 = vmatprep.subr.mxu0 0.0
        %2192 = vmatpush1.msra.mxu0 0.0
        %2193 = vmatprep.subr.mxu0 0.0
        %2194 = vmatpush1.msra.mxu0 0.0
        %2195 = vmatprep.subr.mxu0 0.0
        %2196 = vmatpush1.msra.mxu0 0.0
        %2197 = vmatprep.subr.mxu0 0.0
        %2198 = vmatpush1.msra.mxu0 0.0
        %2199 = vmatprep.subr.mxu0 0.0
        %2200 = vmatpush1.msra.mxu0 0.0
        %2201 = vmatprep.subr.mxu0 0.0
        %2202 = vmatpush1.msra.mxu0 0.0
        %2203 = vmatprep.subr.mxu0 0.0
        %2204 = vmatpush1.msra.mxu0 0.0
        %2205 = vmatprep.subr.mxu0 0.0
        %2206 = vmatpush1.msra.mxu0 %v2096
        %2207 = vmatprep.subr.mxu0 0.0
        %2208 = vmatpush2.msra.mxu0 0.0
        %2209 = vmatprep.subr.mxu0 0.0
        %2210 = vmatpush2.msra.mxu0 0.0
        %2211 = vmatprep.subr.mxu0 0.0
        %2212 = vmatpush2.msra.mxu0 0.0
        %2213 = vmatprep.subr.mxu0 0.0
        %2214 = vmatpush2.msra.mxu0 0.0
        %2215 = vmatprep.subr.mxu0 0.0
        %2216 = vmatpush2.msra.mxu0 0.0
        %2217 = vmatprep.subr.mxu0 0.0
        %2218 = vmatpush2.msra.mxu0 0.0
        %2219 = vmatprep.subr.mxu0 0.0
        %2220 = vmatpush2.msra.mxu0 0.0
        %2221 = vmatprep.subr.mxu0 0.0
        %2222 = vmatpush2.msra.mxu0 0.0
        %2223 = vmatprep.subr.mxu0 0.0
        %2224 = vmatpush2.msra.mxu0 0.0
        %2225 = vmatprep.subr.mxu0 0.0
        %2226 = vmatpush2.msra.mxu0 0.0
        %2227 = vmatprep.subr.mxu0 0.0
        %2228 = vmatpush2.msra.mxu0 0.0
        %2229 = vmatprep.subr.mxu0 0.0
        %2230 = vmatpush2.msra.mxu0 0.0
        %2231 = vmatprep.subr.mxu0 0.0
        %2232 = vmatpush2.msra.mxu0 0.0
        %2233 = vmatprep.subr.mxu0 0.0
        %2234 = vmatpush2.msra.mxu0 0.0
        %2235 = vmatprep.subr.mxu0 0.0
        %2236 = vmatpush2.msra.mxu0 0.0
        %2237 = vmatprep.subr.mxu0 0.0
        %2238 = vmatpush2.msra.mxu0 0.0
        %2239 = vmatprep.mubr.f32.mxu0 0.0
        %2240 = vmatmul.mubr.f32.gmra.mxu0 %v2173
        %v2241 = vpop.f32.mrf.mxu0
        %v2242 = vadd.f32 0.0, %v2241
        %v2243 = vpop.f32.mrf.mxu0
        %2244 = vdwg.mxu0
        %v2246 = vsel %vm1433, %v2093, 0
        %2248 = vmatprep.subr.mxu0 0.0
        %2249 = vmatpush1.msra.mxu0 0.0
        %2250 = vmatprep.subr.mxu0 0.0
        %2251 = vmatpush1.msra.mxu0 0.0
        %2252 = vmatprep.subr.mxu0 0.0
        %2253 = vmatpush1.msra.mxu0 0.0
        %2254 = vmatprep.subr.mxu0 0.0
        %2255 = vmatpush1.msra.mxu0 0.0
        %2256 = vmatprep.subr.mxu0 0.0
        %2257 = vmatpush1.msra.mxu0 0.0
        %2258 = vmatprep.subr.mxu0 0.0
        %2259 = vmatpush1.msra.mxu0 0.0
        %2260 = vmatprep.subr.mxu0 0.0
        %2261 = vmatpush1.msra.mxu0 0.0
        %2262 = vmatprep.subr.mxu0 0.0
        %2263 = vmatpush1.msra.mxu0 0.0
        %2264 = vmatprep.subr.mxu0 0.0
        %2265 = vmatpush1.msra.mxu0 0.0
        %2266 = vmatprep.subr.mxu0 0.0
        %2267 = vmatpush1.msra.mxu0 0.0
        %2268 = vmatprep.subr.mxu0 0.0
        %2269 = vmatpush1.msra.mxu0 0.0
        %2270 = vmatprep.subr.mxu0 0.0
        %2271 = vmatpush1.msra.mxu0 0.0
        %2272 = vmatprep.subr.mxu0 0.0
        %2273 = vmatpush1.msra.mxu0 0.0
        %2274 = vmatprep.subr.mxu0 0.0
        %2275 = vmatpush1.msra.mxu0 0.0
        %2276 = vmatprep.subr.mxu0 0.0
        %2277 = vmatpush1.msra.mxu0 0.0
        %2278 = vmatprep.subr.mxu0 0.0
        %2279 = vmatpush1.msra.mxu0 %v2097
        %2280 = vmatprep.subr.mxu0 0.0
        %2281 = vmatpush2.msra.mxu0 0.0
        %2282 = vmatprep.subr.mxu0 0.0
        %2283 = vmatpush2.msra.mxu0 0.0
        %2284 = vmatprep.subr.mxu0 0.0
        %2285 = vmatpush2.msra.mxu0 0.0
        %2286 = vmatprep.subr.mxu0 0.0
        %2287 = vmatpush2.msra.mxu0 0.0
        %2288 = vmatprep.subr.mxu0 0.0
        %2289 = vmatpush2.msra.mxu0 0.0
        %2290 = vmatprep.subr.mxu0 0.0
        %2291 = vmatpush2.msra.mxu0 0.0
        %2292 = vmatprep.subr.mxu0 0.0
        %2293 = vmatpush2.msra.mxu0 0.0
        %2294 = vmatprep.subr.mxu0 0.0
        %2295 = vmatpush2.msra.mxu0 0.0
        %2296 = vmatprep.subr.mxu0 0.0
        %2297 = vmatpush2.msra.mxu0 0.0
        %2298 = vmatprep.subr.mxu0 0.0
        %2299 = vmatpush2.msra.mxu0 0.0
        %2300 = vmatprep.subr.mxu0 0.0
        %2301 = vmatpush2.msra.mxu0 0.0
        %2302 = vmatprep.subr.mxu0 0.0
        %2303 = vmatpush2.msra.mxu0 0.0
        %2304 = vmatprep.subr.mxu0 0.0
        %2305 = vmatpush2.msra.mxu0 0.0
        %2306 = vmatprep.subr.mxu0 0.0
        %2307 = vmatpush2.msra.mxu0 0.0
        %2308 = vmatprep.subr.mxu0 0.0
        %2309 = vmatpush2.msra.mxu0 0.0
        %2310 = vmatprep.subr.mxu0 0.0
        %2311 = vmatpush2.msra.mxu0 0.0
        %2312 = vmatprep.mubr.f32.mxu0 0.0
        %2313 = vmatmul.mubr.f32.gmra.mxu0 %v2246
        %v2314 = vpop.f32.mrf.mxu0
        %v2315 = vadd.f32 0.0, %v2314
        %v2316 = vpop.f32.mrf.mxu0
        %2317 = vdwg.mxu0
        %v2319 = vsel %vm1433, %v2094, 0
        %2321 = vmatprep.subr.mxu0 0.0
        %2322 = vmatpush1.msra.mxu0 0.0
        %2323 = vmatprep.subr.mxu0 0.0
        %2324 = vmatpush1.msra.mxu0 0.0
        %2325 = vmatprep.subr.mxu0 0.0
        %2326 = vmatpush1.msra.mxu0 0.0
        %2327 = vmatprep.subr.mxu0 0.0
        %2328 = vmatpush1.msra.mxu0 0.0
        %2329 = vmatprep.subr.mxu0 0.0
        %2330 = vmatpush1.msra.mxu0 0.0
        %2331 = vmatprep.subr.mxu0 0.0
        %2332 = vmatpush1.msra.mxu0 0.0
        %2333 = vmatprep.subr.mxu0 0.0
        %2334 = vmatpush1.msra.mxu0 0.0
        %2335 = vmatprep.subr.mxu0 0.0
        %2336 = vmatpush1.msra.mxu0 0.0
        %2337 = vmatprep.subr.mxu0 0.0
        %2338 = vmatpush1.msra.mxu0 0.0
        %2339 = vmatprep.subr.mxu0 0.0
        %2340 = vmatpush1.msra.mxu0 0.0
        %2341 = vmatprep.subr.mxu0 0.0
        %2342 = vmatpush1.msra.mxu0 0.0
        %2343 = vmatprep.subr.mxu0 0.0
        %2344 = vmatpush1.msra.mxu0 0.0
        %2345 = vmatprep.subr.mxu0 0.0
        %2346 = vmatpush1.msra.mxu0 0.0
        %2347 = vmatprep.subr.mxu0 0.0
        %2348 = vmatpush1.msra.mxu0 0.0
        %2349 = vmatprep.subr.mxu0 0.0
        %2350 = vmatpush1.msra.mxu0 0.0
        %2351 = vmatprep.subr.mxu0 0.0
        %2352 = vmatpush1.msra.mxu0 %v2098
        %2353 = vmatprep.subr.mxu0 0.0
        %2354 = vmatpush2.msra.mxu0 0.0
        %2355 = vmatprep.subr.mxu0 0.0
        %2356 = vmatpush2.msra.mxu0 0.0
        %2357 = vmatprep.subr.mxu0 0.0
        %2358 = vmatpush2.msra.mxu0 0.0
        %2359 = vmatprep.subr.mxu0 0.0
        %2360 = vmatpush2.msra.mxu0 0.0
        %2361 = vmatprep.subr.mxu0 0.0
        %2362 = vmatpush2.msra.mxu0 0.0
        %2363 = vmatprep.subr.mxu0 0.0
        %2364 = vmatpush2.msra.mxu0 0.0
        %2365 = vmatprep.subr.mxu0 0.0
        %2366 = vmatpush2.msra.mxu0 0.0
        %2367 = vmatprep.subr.mxu0 0.0
        %2368 = vmatpush2.msra.mxu0 0.0
        %2369 = vmatprep.subr.mxu0 0.0
        %2370 = vmatpush2.msra.mxu0 0.0
        %2371 = vmatprep.subr.mxu0 0.0
        %2372 = vmatpush2.msra.mxu0 0.0
        %2373 = vmatprep.subr.mxu0 0.0
        %2374 = vmatpush2.msra.mxu0 0.0
        %2375 = vmatprep.subr.mxu0 0.0
        %2376 = vmatpush2.msra.mxu0 0.0
        %2377 = vmatprep.subr.mxu0 0.0
        %2378 = vmatpush2.msra.mxu0 0.0
        %2379 = vmatprep.subr.mxu0 0.0
        %2380 = vmatpush2.msra.mxu0 0.0
        %2381 = vmatprep.subr.mxu0 0.0
        %2382 = vmatpush2.msra.mxu0 0.0
        %2383 = vmatprep.subr.mxu0 0.0
        %2384 = vmatpush2.msra.mxu0 0.0
        %2385 = vmatprep.mubr.f32.mxu0 0.0
        %2386 = vmatmul.mubr.f32.gmra.mxu0 %v2319
        %v2387 = vpop.f32.mrf.mxu0
        %v2388 = vadd.f32 0.0, %v2387
        %v2389 = vpop.f32.mrf.mxu0
        %2390 = vdwg.mxu0
        %v2391 = vsel %vm1102, %v2169, 0.0
        %v2392 = vsel %vm1102, %v2242, 0.0
        %v2393 = vadd.f32 %v2391, %v2392
        %v2394 = vsel %vm1102, %v2315, 0.0
        %v2395 = vadd.f32 %v2393, %v2394
        %v2396 = vsel %vm1102, %v2388, 0.0
        %v2397 = vadd.f32 %v2395, %v2396
        %v2398 = vld [vmem:[%s6] sm:$0x1]
        %v2400 = vlaneseq
        %v2401 = vshrl.u32 %v2400, 7
        %v2402 = vsub.s32 0, %v2401
        %v2403 = vrot.slane %v2398, %v2402
        %v2405 = vadd.f32 %v2397, %v2403
        %2406 = vst.msk [vmem:[%s323] sm:$0xff] %vm1102, %v2405
        %s2407 = sand.u32 %s207, 1
        %s2408 = scalar_lea.sflag [#allocation5], %s2407
        %s2409 = sand.u32 %s207, 1
        %s2410 = smul.addr %s2409, 8
        %s2411 = scalar_lea.vmem [#allocation4], %s2410
        // Predicated region
        $region53: #{tpu_custom_call.1} parent=47 // pred_check
          %p2412 = pneg %p217
        $region54: #{tpu_custom_call.1} parent=47 // pred_check_branch
          %2414 = sbr.rel (%p2412) target = $region56
        $region55: #{tpu_custom_call.1} parent=47 // pred_region
          %s2416 = ssub.s32 128, 128
          %2417 = vsyncadd %s2408, %s2416
          %s2418 = smul.addr %s25, 2
          %s2419 = sadd.s32 %s26, %s2418
          %s2420 = smul.addr %s2419, 128
          %s2421 = scalar_lea.hbm %s7, %s2420
          %s2423 = sshll.u32 %s2411, 4
          %s2424 = int_to_ptr.vmem [resolvable:$true] %s2423
          %2426 = dma.vmem_to_hbm [thread:$0]  %s2424, 128, %s2421, %s2408
        $region56: #{tpu_custom_call.1} parent=47 // pred_fallthru
          _
      $region48: #{tpu_custom_call.1} parent=5 // pred_fallthru
        _
      %p2427 = scmp.le.s32.totalorder 2, %s16
      // Predicated region
      $region57: #{tpu_custom_call.1} parent=5 // pred_check
        %p2428 = pneg %p2427
      $region58: #{tpu_custom_call.1} parent=5 // pred_check_branch
        %2430 = sbr.rel (%p2428) target = $region60
      $region59: #{tpu_custom_call.1} parent=5 // pred_region
        %s2431 = ssub.s32 %s16, 2
        // Predicated region
        $region61: #{tpu_custom_call.1} parent=59 // pred_check
          %p2432 = pneg %p223
        $region62: #{tpu_custom_call.1} parent=59 // pred_check_branch
          %2434 = sbr.rel (%p2432) target = $region64
        $region63: #{tpu_custom_call.1} parent=59 // pred_region
          %s2435 = sand.u32 %s208, 1
          %s2436 = scalar_lea.sflag [#allocation5], %s2435
          %s2437 = sand.u32 %s208, 1
          %s2438 = smul.addr %s2437, 8
          %s2439 = scalar_lea.vmem [#allocation4], %s2438
          %2440 = dma.done %s2436, 128
        $region64: #{tpu_custom_call.1} parent=59 // pred_fallthru
          _
      $region60: #{tpu_custom_call.1} parent=5 // pred_fallthru
        _
    $region6: #{tpu_custom_call.1} parent=1 // loop_footer
      %s20 = sadd.s32 1, %s16
    $region7: #{tpu_custom_call.1} parent=1 // loop_footer_branch
      %15 = sbr.rel target = $region3
    $region8: #{tpu_custom_call.1} parent=1 // loop_exit
      _
    %2441 = vsyncpa [#allocation5], 1
    %s2442 = scalar_lea.sflag [#allocation5], 1
    %2443 = vsyncpa %s2442, 1

</llo_original>
